<compile_context>
chip_gen: v7x
topology: tpu7x:2x2x1
jax: 0.10.0
libtpu: 0.0.40
codegen_flags: <defaults>
</compile_context>

<pallas_src>
import jax
import jax.numpy as jnp
from jax.experimental import pallas as pl
from jax.experimental.pallas import tpu as pltpu

# -----------------------------------------------------------------------------
# config (small, deterministic)
# -----------------------------------------------------------------------------
B = 2                  # batch
H = W = 16             # spatial
CIN = 3                # image channels
CCONV = 32             # synthetic backbone conv channels
CPAD = 64              # conv channels padded (lane-friendly, zero tail)
K_PAD = 32             # im2col contraction dim padded (9*CIN=27 -> 32)
BACKBONE_DIM = 1000    # backbone feature width (so concat = 1064, as in module)
NUM_FEATS = 16         # len(feature_cols)
NUM_CLASSES = 5
AUX_NUM_CLASSES = 3
OUT_PAD = 128          # lane-dense fused output width (head | aux | zeros)
MROW = 8               # padded M (batch rows) used inside the kernel

SELU_ALPHA = 1.6732632423543772
SELU_SCALE = 1.0507009873554805


def _selu(x):
    neg = SELU_ALPHA * (jnp.exp(jnp.minimum(x, 0.0)) - 1.0)
    return SELU_SCALE * jnp.where(x > 0, x, neg)


# -----------------------------------------------------------------------------
# Single fused kernel (7 inputs, 1 output, no grid):
#   conv (im2col matmul) + ReLU + GAP (matmul) -> folded head-1 / aux-1
#   feature MLP (SELU x5, dropout = identity)
#   merged relu(head1|aux1) -> block-diag (head2|aux2) -> [MROW, 128] output
# -----------------------------------------------------------------------------
def fused_kernel(patch_ref, feat_ref, bias_ref,
                 w512_ref, w256_ref, w128_ref, w64_ref, out_ref):
    f32 = jnp.float32
    bf16 = jnp.bfloat16

    def dot(x, w):
        return jnp.dot(x.astype(bf16), w.astype(bf16), preferred_element_type=f32)

    # --- static views into the packed weight slabs (all offsets 16-row aligned)
    w1 = w512_ref[0:16, :]              # [16, 512]   dense1
    avg = w512_ref[16:24, :]            # [8, 512]    GAP matrix (rows >= B zero)
    w2 = w256_ref[0:512, :]             # [512, 256]  dense2
    gw = w256_ref[512:576, :]           # [64, 256]   folded wp @ [head1|aux1]
    h1wb = w256_ref[576:640, :]         # [64, 256]   x2 part of [head1|aux1]
    w3 = w128_ref[0:256, :]             # [256, 128]  dense3
    h2w = w128_ref[256:512, :]          # [256, 128]  block-diag [head2|aux2]
    w4 = w64_ref[0:128, :]              # [128, 64]   dense4
    w5 = w64_ref[128:192, :]            # [64, 64]    dense5
    cw = w64_ref[192:224, :]            # [32, 64]    im2col conv weight (padded)

    cb = bias_ref[0:1, 0:CPAD]
    b1 = bias_ref[1:2, 0:512]
    b2 = bias_ref[2:3, 0:256]
    b3 = bias_ref[3:4, 0:128]
    b4 = bias_ref[4:5, 0:64]
    b5 = bias_ref[5:6, 0:64]
    h1b = bias_ref[6:7, 0:256]
    h2b = bias_ref[7:8, 0:OUT_PAD]

    # --- synthetic backbone: conv3x3 (im2col matmul) + ReLU + GAP on the MXU
    conv = jnp.maximum(dot(patch_ref[...], cw) + cb, 0.0)       # [B*H*W, CPAD]
    gap = dot(avg, conv)                                        # [MROW, CPAD]

    # --- feature MLP (dropouts are identity at inference)
    x2 = _selu(dot(feat_ref[...], w1) + b1)
    x2 = _selu(dot(x2, w2) + b2)
    x2 = _selu(dot(x2, w3) + b3)
    x2 = _selu(dot(x2, w4) + b4)
    x2 = _selu(dot(x2, w5) + b5)                                # [MROW, 64]

    # --- merged heads, backbone projection folded into gw / h1b
    h = jnp.maximum(dot(gap, gw) + dot(x2, h1wb) + h1b, 0.0)    # [MROW, 256]

    # block-diagonal second layer -> lane-dense output
    out_ref[...] = dot(h, h2w) + h2b                            # [MROW, 128]


# -----------------------------------------------------------------------------
# one-time weight preparation (folding, merging, packing, bf16 cast)
# -----------------------------------------------------------------------------
def prepare_params(params):
    bf16 = jnp.bfloat16

    # conv weight: PyTorch (cout, cin, kh, kw) -> (kh, kw, cin, cout) to match
    # the im2col tap ordering, then flatten + zero-pad to [K_PAD, CPAD].
    cw = jnp.transpose(params["conv_w"], (2, 3, 1, 0)).reshape(9 * CIN, CCONV)
    cw = jnp.pad(cw, ((0, K_PAD - 9 * CIN), (0, CPAD - CCONV)))          # [32, 64]

    # merged head / aux_head first layer, with backbone projection folded in.
    h1w = jnp.concatenate([params["wh1a"], params["wa1a"]], axis=1)      # [1000, 256]
    h1wb = jnp.concatenate([params["wh1b"], params["wa1b"]], axis=1)     # [64, 256]
    h1b = jnp.concatenate([params["bh1"], params["ba1"]], axis=1)        # [1, 256]
    gw = jnp.pad(params["wp"] @ h1w, ((0, CPAD - CCONV), (0, 0)))        # [64, 256]
    h1b = h1b + params["bp"] @ h1w                                       # [1, 256]

    # block-diagonal merged second layer -> one lane-dense [*, 128] output.
    h2w = jnp.zeros((256, OUT_PAD), jnp.float32)
    h2w = h2w.at[:128, :NUM_CLASSES].set(params["wh2"])
    h2w = h2w.at[128:, NUM_CLASSES:NUM_CLASSES + AUX_NUM_CLASSES].set(params["wa2"])
    h2b = jnp.zeros((1, OUT_PAD), jnp.float32)
    h2b = h2b.at[:, :NUM_CLASSES].set(params["bh2"])
    h2b = h2b.at[:, NUM_CLASSES:NUM_CLASSES + AUX_NUM_CLASSES].set(params["ba2"])

    # global-average-pool as a matmul; 1/(H*W) folded into the matrix.
    avg = jnp.zeros((MROW, B * H * W), jnp.float32)
    for b in range(B):
        avg = avg.at[b, b * H * W:(b + 1) * H * W].set(1.0 / (H * W))

    # weight slabs (bf16), one DMA each.
    w512 = jnp.concatenate([params["w1"], avg], axis=0).astype(bf16)           # [24, 512]
    w256 = jnp.concatenate([params["w2"], gw, h1wb], axis=0).astype(bf16)      # [640, 256]
    w128 = jnp.concatenate([params["w3"], h2w], axis=0).astype(bf16)           # [512, 128]
    w64 = jnp.concatenate([params["w4"], params["w5"], cw], axis=0).astype(bf16)  # [224, 64]

    # bias slab (f32), one DMA.
    bias = jnp.zeros((8, 512), jnp.float32)
    bias = bias.at[0, :CCONV].set(params["conv_b"][0])
    bias = bias.at[1, :512].set(params["b1"][0])
    bias = bias.at[2, :256].set(params["b2"][0])
    bias = bias.at[3, :128].set(params["b3"][0])
    bias = bias.at[4, :64].set(params["b4"][0])
    bias = bias.at[5, :64].set(params["b5"][0])
    bias = bias.at[6, :256].set(h1b[0])
    bias = bias.at[7, :OUT_PAD].set(h2b[0])

    return {"bias": bias, "w512": w512, "w256": w256, "w128": w128, "w64": w64}


# -----------------------------------------------------------------------------
# forward wrapper (im2col + one pallas_call)
# -----------------------------------------------------------------------------
_VMEM = pl.BlockSpec(memory_space=pltpu.MemorySpace.VMEM)


@jax.jit
def custom_model_forward(img_nchw, feat, prep):
    # NCHW -> NHWC, zero-pad, im2col (3x3 taps, (kh, kw, cin) order) -> [B*H*W, 32]
    img = jnp.transpose(img_nchw, (0, 2, 3, 1)).astype(jnp.float32)      # [B,H,W,CIN]
    imgp = jnp.pad(img, ((0, 0), (1, 1), (1, 1), (0, 0)))
    taps = jnp.stack(
        [imgp[:, kh:kh + H, kw:kw + W, :] for kh in range(3) for kw in range(3)],
        axis=3)                                                          # [B,H,W,9,CIN]
    patches = taps.reshape(B * H * W, 9 * CIN)
    patches = jnp.pad(patches, ((0, 0), (0, K_PAD - 9 * CIN))).astype(jnp.bfloat16)

    feat_p = jnp.pad(feat.astype(jnp.bfloat16), ((0, MROW - B), (0, 0)))  # [MROW, 16]

    out = pl.pallas_call(
        fused_kernel,
        out_shape=jax.ShapeDtypeStruct((MROW, OUT_PAD), jnp.float32),
        in_specs=[_VMEM] * 7,
        out_specs=_VMEM,
    )(patches, feat_p, prep["bias"], prep["w512"], prep["w256"],
      prep["w128"], prep["w64"])

    return {"head": out[:B, :NUM_CLASSES],
            "aux_head": out[:B, NUM_CLASSES:NUM_CLASSES + AUX_NUM_CLASSES]}


# -----------------------------------------------------------------------------
# parameter init (synthetic, deterministic)
# -----------------------------------------------------------------------------
def init_params(key):
    keys = jax.random.split(key, 32)
    k = iter(keys)

    def lin(kk, fan_in, fan_out):
        s = 1.0 / jnp.sqrt(jnp.float32(fan_in))
        return jax.random.uniform(kk, (fan_in, fan_out), jnp.float32, -s, s)

    p = {}
    # conv weight in PyTorch layout (cout, cin, kh, kw)
    p["conv_w"] = jax.random.normal(next(k), (CCONV, CIN, 3, 3), jnp.float32) * 0.1
    p["conv_b"] = jnp.zeros((1, CCONV), jnp.float32)

    p["wp"] = lin(next(k), CCONV, BACKBONE_DIM)
    p["bp"] = jnp.zeros((1, BACKBONE_DIM), jnp.float32)

    p["w1"] = lin(next(k), NUM_FEATS, 512); p["b1"] = jnp.zeros((1, 512), jnp.float32)
    p["w2"] = lin(next(k), 512, 256);       p["b2"] = jnp.zeros((1, 256), jnp.float32)
    p["w3"] = lin(next(k), 256, 128);       p["b3"] = jnp.zeros((1, 128), jnp.float32)
    p["w4"] = lin(next(k), 128, 64);        p["b4"] = jnp.zeros((1, 64), jnp.float32)
    p["w5"] = lin(next(k), 64, 64);         p["b5"] = jnp.zeros((1, 64), jnp.float32)

    # head1 / aux_head1 split: first 1000 rows act on x1 (backbone), last 64 on x2
    p["wh1a"] = lin(next(k), BACKBONE_DIM, 128)
    p["wh1b"] = lin(next(k), 64, 128)
    p["bh1"] = jnp.zeros((1, 128), jnp.float32)
    p["wh2"] = lin(next(k), 128, NUM_CLASSES)
    p["bh2"] = jnp.zeros((1, NUM_CLASSES), jnp.float32)

    p["wa1a"] = lin(next(k), BACKBONE_DIM, 128)
    p["wa1b"] = lin(next(k), 64, 128)
    p["ba1"] = jnp.zeros((1, 128), jnp.float32)
    p["wa2"] = lin(next(k), 128, AUX_NUM_CLASSES)
    p["ba2"] = jnp.zeros((1, AUX_NUM_CLASSES), jnp.float32)
    return p


if __name__ == "__main__":
    key = jax.random.PRNGKey(0)
    k_img, k_feat, k_par = jax.random.split(key, 3)

    img = jax.random.normal(k_img, (B, CIN, H, W), jnp.float32)    # NCHW like PyTorch
    feat = jax.random.normal(k_feat, (B, NUM_FEATS), jnp.float32)
    params = init_params(k_par)

    prep = prepare_params(params)          # one-time weight fold / merge / pack
    prep = jax.device_put(prep)

    out = custom_model_forward(img, feat, prep)
    jax.block_until_ready(out)

    assert out["head"].shape == (B, NUM_CLASSES)
    assert out["aux_head"].shape == (B, AUX_NUM_CLASSES)
    assert bool(jnp.all(jnp.isfinite(out["head"])))
    assert bool(jnp.all(jnp.isfinite(out["aux_head"])))
    print("KERNEL_OK")
</pallas_src>

<mosaic_0001>
module attributes {stable_mosaic.version = 11 : i64} {
  func.func @fused_kernel(%arg0: memref<512x32xbf16, #tpu.memory_space<vmem>>, %arg1: memref<8x16xbf16, #tpu.memory_space<vmem>>, %arg2: memref<8x512xf32, #tpu.memory_space<vmem>>, %arg3: memref<24x512xbf16, #tpu.memory_space<vmem>>, %arg4: memref<640x256xbf16, #tpu.memory_space<vmem>>, %arg5: memref<512x128xbf16, #tpu.memory_space<vmem>>, %arg6: memref<224x64xbf16, #tpu.memory_space<vmem>>, %arg7: memref<8x128xf32, #tpu.memory_space<vmem>>) attributes {dimension_semantics = [], scalar_prefetch = 0 : i64, scratch_operands = 0 : i64, tpu.core_type = #tpu.core_type<tc>} {
    %c0 = arith.constant 0 : index
    %c0_0 = arith.constant 0 : index
    %0 = vector.load %arg3[%c0, %c0_0] : memref<24x512xbf16, #tpu.memory_space<vmem>>, vector<16x512xbf16>
    %c16 = arith.constant 16 : index
    %c0_1 = arith.constant 0 : index
    %1 = vector.load %arg3[%c16, %c0_1] : memref<24x512xbf16, #tpu.memory_space<vmem>>, vector<8x512xbf16>
    %c0_2 = arith.constant 0 : index
    %c0_3 = arith.constant 0 : index
    %2 = vector.load %arg4[%c0_2, %c0_3] : memref<640x256xbf16, #tpu.memory_space<vmem>>, vector<512x256xbf16>
    %c512 = arith.constant 512 : index
    %c0_4 = arith.constant 0 : index
    %3 = vector.load %arg4[%c512, %c0_4] : memref<640x256xbf16, #tpu.memory_space<vmem>>, vector<64x256xbf16>
    %c576 = arith.constant 576 : index
    %c0_5 = arith.constant 0 : index
    %4 = vector.load %arg4[%c576, %c0_5] : memref<640x256xbf16, #tpu.memory_space<vmem>>, vector<64x256xbf16>
    %c0_6 = arith.constant 0 : index
    %c0_7 = arith.constant 0 : index
    %5 = vector.load %arg5[%c0_6, %c0_7] : memref<512x128xbf16, #tpu.memory_space<vmem>>, vector<256x128xbf16>
    %c256 = arith.constant 256 : index
    %c0_8 = arith.constant 0 : index
    %6 = vector.load %arg5[%c256, %c0_8] : memref<512x128xbf16, #tpu.memory_space<vmem>>, vector<256x128xbf16>
    %c0_9 = arith.constant 0 : index
    %c0_10 = arith.constant 0 : index
    %7 = vector.load %arg6[%c0_9, %c0_10] : memref<224x64xbf16, #tpu.memory_space<vmem>>, vector<128x64xbf16>
    %c128 = arith.constant 128 : index
    %c0_11 = arith.constant 0 : index
    %8 = vector.load %arg6[%c128, %c0_11] : memref<224x64xbf16, #tpu.memory_space<vmem>>, vector<64x64xbf16>
    %c192 = arith.constant 192 : index
    %c0_12 = arith.constant 0 : index
    %9 = vector.load %arg6[%c192, %c0_12] : memref<224x64xbf16, #tpu.memory_space<vmem>>, vector<32x64xbf16>
    %c0_13 = arith.constant 0 : index
    %c0_14 = arith.constant 0 : index
    %10 = vector.load %arg2[%c0_13, %c0_14] : memref<8x512xf32, #tpu.memory_space<vmem>>, vector<1x64xf32>
    %c1 = arith.constant 1 : index
    %c0_15 = arith.constant 0 : index
    %11 = vector.load %arg2[%c1, %c0_15] : memref<8x512xf32, #tpu.memory_space<vmem>>, vector<1x512xf32>
    %c2 = arith.constant 2 : index
    %c0_16 = arith.constant 0 : index
    %12 = vector.load %arg2[%c2, %c0_16] : memref<8x512xf32, #tpu.memory_space<vmem>>, vector<1x256xf32>
    %c3 = arith.constant 3 : index
    %c0_17 = arith.constant 0 : index
    %13 = vector.load %arg2[%c3, %c0_17] : memref<8x512xf32, #tpu.memory_space<vmem>>, vector<1x128xf32>
    %c4 = arith.constant 4 : index
    %c0_18 = arith.constant 0 : index
    %14 = vector.load %arg2[%c4, %c0_18] : memref<8x512xf32, #tpu.memory_space<vmem>>, vector<1x64xf32>
    %c5 = arith.constant 5 : index
    %c0_19 = arith.constant 0 : index
    %15 = vector.load %arg2[%c5, %c0_19] : memref<8x512xf32, #tpu.memory_space<vmem>>, vector<1x64xf32>
    %c6 = arith.constant 6 : index
    %c0_20 = arith.constant 0 : index
    %16 = vector.load %arg2[%c6, %c0_20] : memref<8x512xf32, #tpu.memory_space<vmem>>, vector<1x256xf32>
    %c7 = arith.constant 7 : index
    %c0_21 = arith.constant 0 : index
    %17 = vector.load %arg2[%c7, %c0_21] : memref<8x512xf32, #tpu.memory_space<vmem>>, vector<1x128xf32>
    %c0_22 = arith.constant 0 : index
    %c0_23 = arith.constant 0 : index
    %18 = vector.load %arg0[%c0_22, %c0_23] : memref<512x32xbf16, #tpu.memory_space<vmem>>, vector<512x32xbf16>
    %cst = arith.constant dense<0.000000e+00> : vector<512x64xf32>
    %19 = tpu.matmul %18, %9, %cst {dimension_numbers = #tpu.dot_dimension_numbers<[1], [0], [0], [1], [0, 0, 1, 1], [], []>} : vector<512x32xbf16>, vector<32x64xbf16>, vector<512x64xf32> -> vector<512x64xf32>
    %20 = vector.broadcast %10 : vector<1x64xf32> to vector<512x64xf32>
    %21 = arith.addf %19, %20 : vector<512x64xf32>
    %cst_24 = arith.constant 0.000000e+00 : f32
    %22 = vector.broadcast %cst_24 : f32 to vector<512x64xf32>
    %23 = arith.maximumf %21, %22 : vector<512x64xf32>
    %24 = arith.truncf %23 : vector<512x64xf32> to vector<512x64xbf16>
    %cst_25 = arith.constant dense<0.000000e+00> : vector<8x64xf32>
    %25 = tpu.matmul %1, %24, %cst_25 {dimension_numbers = #tpu.dot_dimension_numbers<[1], [0], [0], [1], [0, 0, 1, 1], [], []>} : vector<8x512xbf16>, vector<512x64xbf16>, vector<8x64xf32> -> vector<8x64xf32>
    %c0_26 = arith.constant 0 : index
    %c0_27 = arith.constant 0 : index
    %26 = vector.load %arg1[%c0_26, %c0_27] : memref<8x16xbf16, #tpu.memory_space<vmem>>, vector<8x16xbf16>
    %cst_28 = arith.constant dense<0.000000e+00> : vector<8x512xf32>
    %27 = tpu.matmul %26, %0, %cst_28 {dimension_numbers = #tpu.dot_dimension_numbers<[1], [0], [0], [1], [0, 0, 1, 1], [], []>} : vector<8x16xbf16>, vector<16x512xbf16>, vector<8x512xf32> -> vector<8x512xf32>
    %28 = vector.broadcast %11 : vector<1x512xf32> to vector<8x512xf32>
    %29 = arith.addf %27, %28 : vector<8x512xf32>
    %cst_29 = arith.constant 0.000000e+00 : f32
    %30 = vector.broadcast %cst_29 : f32 to vector<8x512xf32>
    %31 = arith.minimumf %29, %30 : vector<8x512xf32>
    %32 = math.exp %31 : vector<8x512xf32>
    %cst_30 = arith.constant 1.000000e+00 : f32
    %33 = vector.broadcast %cst_30 : f32 to vector<8x512xf32>
    %34 = arith.subf %32, %33 : vector<8x512xf32>
    %cst_31 = arith.constant 1.67326319 : f32
    %35 = vector.broadcast %cst_31 : f32 to vector<8x512xf32>
    %36 = arith.mulf %35, %34 : vector<8x512xf32>
    %cst_32 = arith.constant 0.000000e+00 : f32
    %37 = vector.broadcast %cst_32 : f32 to vector<8x512xf32>
    %38 = arith.cmpf ogt, %29, %37 : vector<8x512xf32>
    %39 = arith.select %38, %29, %36 : vector<8x512xi1>, vector<8x512xf32>
    %cst_33 = arith.constant 1.05070102 : f32
    %40 = vector.broadcast %cst_33 : f32 to vector<8x512xf32>
    %41 = arith.mulf %40, %39 : vector<8x512xf32>
    %42 = arith.truncf %41 : vector<8x512xf32> to vector<8x512xbf16>
    %cst_34 = arith.constant dense<0.000000e+00> : vector<8x256xf32>
    %43 = tpu.matmul %42, %2, %cst_34 {dimension_numbers = #tpu.dot_dimension_numbers<[1], [0], [0], [1], [0, 0, 1, 1], [], []>} : vector<8x512xbf16>, vector<512x256xbf16>, vector<8x256xf32> -> vector<8x256xf32>
    %44 = vector.broadcast %12 : vector<1x256xf32> to vector<8x256xf32>
    %45 = arith.addf %43, %44 : vector<8x256xf32>
    %cst_35 = arith.constant 0.000000e+00 : f32
    %46 = vector.broadcast %cst_35 : f32 to vector<8x256xf32>
    %47 = arith.minimumf %45, %46 : vector<8x256xf32>
    %48 = math.exp %47 : vector<8x256xf32>
    %cst_36 = arith.constant 1.000000e+00 : f32
    %49 = vector.broadcast %cst_36 : f32 to vector<8x256xf32>
    %50 = arith.subf %48, %49 : vector<8x256xf32>
    %cst_37 = arith.constant 1.67326319 : f32
    %51 = vector.broadcast %cst_37 : f32 to vector<8x256xf32>
    %52 = arith.mulf %51, %50 : vector<8x256xf32>
    %cst_38 = arith.constant 0.000000e+00 : f32
    %53 = vector.broadcast %cst_38 : f32 to vector<8x256xf32>
    %54 = arith.cmpf ogt, %45, %53 : vector<8x256xf32>
    %55 = arith.select %54, %45, %52 : vector<8x256xi1>, vector<8x256xf32>
    %cst_39 = arith.constant 1.05070102 : f32
    %56 = vector.broadcast %cst_39 : f32 to vector<8x256xf32>
    %57 = arith.mulf %56, %55 : vector<8x256xf32>
    %58 = arith.truncf %57 : vector<8x256xf32> to vector<8x256xbf16>
    %cst_40 = arith.constant dense<0.000000e+00> : vector<8x128xf32>
    %59 = tpu.matmul %58, %5, %cst_40 {dimension_numbers = #tpu.dot_dimension_numbers<[1], [0], [0], [1], [0, 0, 1, 1], [], []>} : vector<8x256xbf16>, vector<256x128xbf16>, vector<8x128xf32> -> vector<8x128xf32>
    %60 = vector.broadcast %13 : vector<1x128xf32> to vector<8x128xf32>
    %61 = arith.addf %59, %60 : vector<8x128xf32>
    %cst_41 = arith.constant 0.000000e+00 : f32
    %62 = vector.broadcast %cst_41 : f32 to vector<8x128xf32>
    %63 = arith.minimumf %61, %62 : vector<8x128xf32>
    %64 = math.exp %63 : vector<8x128xf32>
    %cst_42 = arith.constant 1.000000e+00 : f32
    %65 = vector.broadcast %cst_42 : f32 to vector<8x128xf32>
    %66 = arith.subf %64, %65 : vector<8x128xf32>
    %cst_43 = arith.constant 1.67326319 : f32
    %67 = vector.broadcast %cst_43 : f32 to vector<8x128xf32>
    %68 = arith.mulf %67, %66 : vector<8x128xf32>
    %cst_44 = arith.constant 0.000000e+00 : f32
    %69 = vector.broadcast %cst_44 : f32 to vector<8x128xf32>
    %70 = arith.cmpf ogt, %61, %69 : vector<8x128xf32>
    %71 = arith.select %70, %61, %68 : vector<8x128xi1>, vector<8x128xf32>
    %cst_45 = arith.constant 1.05070102 : f32
    %72 = vector.broadcast %cst_45 : f32 to vector<8x128xf32>
    %73 = arith.mulf %72, %71 : vector<8x128xf32>
    %74 = arith.truncf %73 : vector<8x128xf32> to vector<8x128xbf16>
    %cst_46 = arith.constant dense<0.000000e+00> : vector<8x64xf32>
    %75 = tpu.matmul %74, %7, %cst_46 {dimension_numbers = #tpu.dot_dimension_numbers<[1], [0], [0], [1], [0, 0, 1, 1], [], []>} : vector<8x128xbf16>, vector<128x64xbf16>, vector<8x64xf32> -> vector<8x64xf32>
    %76 = vector.broadcast %14 : vector<1x64xf32> to vector<8x64xf32>
    %77 = arith.addf %75, %76 : vector<8x64xf32>
    %cst_47 = arith.constant 0.000000e+00 : f32
    %78 = vector.broadcast %cst_47 : f32 to vector<8x64xf32>
    %79 = arith.minimumf %77, %78 : vector<8x64xf32>
    %80 = math.exp %79 : vector<8x64xf32>
    %cst_48 = arith.constant 1.000000e+00 : f32
    %81 = vector.broadcast %cst_48 : f32 to vector<8x64xf32>
    %82 = arith.subf %80, %81 : vector<8x64xf32>
    %cst_49 = arith.constant 1.67326319 : f32
    %83 = vector.broadcast %cst_49 : f32 to vector<8x64xf32>
    %84 = arith.mulf %83, %82 : vector<8x64xf32>
    %cst_50 = arith.constant 0.000000e+00 : f32
    %85 = vector.broadcast %cst_50 : f32 to vector<8x64xf32>
    %86 = arith.cmpf ogt, %77, %85 : vector<8x64xf32>
    %87 = arith.select %86, %77, %84 : vector<8x64xi1>, vector<8x64xf32>
    %cst_51 = arith.constant 1.05070102 : f32
    %88 = vector.broadcast %cst_51 : f32 to vector<8x64xf32>
    %89 = arith.mulf %88, %87 : vector<8x64xf32>
    %90 = arith.truncf %89 : vector<8x64xf32> to vector<8x64xbf16>
    %cst_52 = arith.constant dense<0.000000e+00> : vector<8x64xf32>
    %91 = tpu.matmul %90, %8, %cst_52 {dimension_numbers = #tpu.dot_dimension_numbers<[1], [0], [0], [1], [0, 0, 1, 1], [], []>} : vector<8x64xbf16>, vector<64x64xbf16>, vector<8x64xf32> -> vector<8x64xf32>
    %92 = vector.broadcast %15 : vector<1x64xf32> to vector<8x64xf32>
    %93 = arith.addf %91, %92 : vector<8x64xf32>
    %cst_53 = arith.constant 0.000000e+00 : f32
    %94 = vector.broadcast %cst_53 : f32 to vector<8x64xf32>
    %95 = arith.minimumf %93, %94 : vector<8x64xf32>
    %96 = math.exp %95 : vector<8x64xf32>
    %cst_54 = arith.constant 1.000000e+00 : f32
    %97 = vector.broadcast %cst_54 : f32 to vector<8x64xf32>
    %98 = arith.subf %96, %97 : vector<8x64xf32>
    %cst_55 = arith.constant 1.67326319 : f32
    %99 = vector.broadcast %cst_55 : f32 to vector<8x64xf32>
    %100 = arith.mulf %99, %98 : vector<8x64xf32>
    %cst_56 = arith.constant 0.000000e+00 : f32
    %101 = vector.broadcast %cst_56 : f32 to vector<8x64xf32>
    %102 = arith.cmpf ogt, %93, %101 : vector<8x64xf32>
    %103 = arith.select %102, %93, %100 : vector<8x64xi1>, vector<8x64xf32>
    %cst_57 = arith.constant 1.05070102 : f32
    %104 = vector.broadcast %cst_57 : f32 to vector<8x64xf32>
    %105 = arith.mulf %104, %103 : vector<8x64xf32>
    %106 = arith.truncf %25 : vector<8x64xf32> to vector<8x64xbf16>
    %cst_58 = arith.constant dense<0.000000e+00> : vector<8x256xf32>
    %107 = tpu.matmul %106, %3, %cst_58 {dimension_numbers = #tpu.dot_dimension_numbers<[1], [0], [0], [1], [0, 0, 1, 1], [], []>} : vector<8x64xbf16>, vector<64x256xbf16>, vector<8x256xf32> -> vector<8x256xf32>
    %108 = arith.truncf %105 : vector<8x64xf32> to vector<8x64xbf16>
    %cst_59 = arith.constant dense<0.000000e+00> : vector<8x256xf32>
    %109 = tpu.matmul %108, %4, %cst_59 {dimension_numbers = #tpu.dot_dimension_numbers<[1], [0], [0], [1], [0, 0, 1, 1], [], []>} : vector<8x64xbf16>, vector<64x256xbf16>, vector<8x256xf32> -> vector<8x256xf32>
    %110 = arith.addf %107, %109 : vector<8x256xf32>
    %111 = vector.broadcast %16 : vector<1x256xf32> to vector<8x256xf32>
    %112 = arith.addf %110, %111 : vector<8x256xf32>
    %cst_60 = arith.constant 0.000000e+00 : f32
    %113 = vector.broadcast %cst_60 : f32 to vector<8x256xf32>
    %114 = arith.maximumf %112, %113 : vector<8x256xf32>
    %115 = arith.truncf %114 : vector<8x256xf32> to vector<8x256xbf16>
    %cst_61 = arith.constant dense<0.000000e+00> : vector<8x128xf32>
    %116 = tpu.matmul %115, %6, %cst_61 {dimension_numbers = #tpu.dot_dimension_numbers<[1], [0], [0], [1], [0, 0, 1, 1], [], []>} : vector<8x256xbf16>, vector<256x128xbf16>, vector<8x128xf32> -> vector<8x128xf32>
    %117 = vector.broadcast %17 : vector<1x128xf32> to vector<8x128xf32>
    %118 = arith.addf %116, %117 : vector<8x128xf32>
    %c0_62 = arith.constant 0 : index
    %c0_63 = arith.constant 0 : index
    %119 = vector.load %arg7[%c0_62, %c0_63] : memref<8x128xf32, #tpu.memory_space<vmem>>, vector<8x128xf32>
    tpu.vector_store %arg7[%c0_62, %c0_63], %118 {strides = array<i32>} : memref<8x128xf32, #tpu.memory_space<vmem>>, vector<8x128xf32>,
    return
  }
}

</mosaic_0001>

<llo_original>
// kernel: custom_model_forward.1
$region0: #{custom_model_forward.1}
  #allocation0 [shape = 'u32[]', space=smem, size = 0x4, offset = 0x4, fixed_abs, tag = 'smem constant byte address 0x4 - core index']
  #allocation1 [shape = 'u32[144,128]{1,0:T(1,128)}', space=vmem, size = 0x12000, scoped, tag = 'internal scratch']
  %s0 = inlined_call_operand.vmem [shape: bf16[512,32], index: 0, kind: input, shape index: {}]
  %s1 = inlined_call_operand.vmem [shape: bf16[8,16], index: 1, kind: input, shape index: {}]
  %s2 = inlined_call_operand.vmem [shape: f32[8,512], index: 2, kind: input, shape index: {}]
  %s3 = inlined_call_operand.vmem [shape: bf16[24,512], index: 3, kind: input, shape index: {}]
  %s4 = inlined_call_operand.vmem [shape: bf16[640,256], index: 4, kind: input, shape index: {}]
  %s5 = inlined_call_operand.vmem [shape: bf16[512,128], index: 5, kind: input, shape index: {}]
  %s6 = inlined_call_operand.vmem [shape: bf16[224,64], index: 6, kind: input, shape index: {}]
  %s7 = inlined_call_operand.vmem [shape: f32[8,128], index: 7, kind: output, shape index: {}]
  %s8 = sld [smem:[#allocation0]]
  $region38: #{custom_model_forward.1} parent=0
    _
  %s10 = ssub.s32 1, %s8
  %s11 = scalar_select 0, %s10, %s8
  // Predicated region
  $region2: #{custom_model_forward.1} parent=0 // pred_check
    _
  $region3: #{custom_model_forward.1} parent=0 // pred_check_branch
    %13 = sbr.rel (0) target = $region5
  $region4: #{custom_model_forward.1} parent=0 // pred_region
    _
  $region5: #{custom_model_forward.1} parent=0 // pred_fallthru
    _
  // Predicated region
  $region6: #{custom_model_forward.1} parent=0 // pred_check
    _
  $region7: #{custom_model_forward.1} parent=0 // pred_check_branch
    %15 = sbr.rel (0) target = $region9
  $region8: #{custom_model_forward.1} parent=0 // pred_region
    _
  $region9: #{custom_model_forward.1} parent=0 // pred_fallthru
    _
  // Predicated region
  $region10: #{custom_model_forward.1} parent=0 // pred_check
    _
  $region11: #{custom_model_forward.1} parent=0 // pred_check_branch
    %17 = sbr.rel (0) target = $region13
  $region12: #{custom_model_forward.1} parent=0 // pred_region
    _
  $region13: #{custom_model_forward.1} parent=0 // pred_fallthru
    _
  // Predicated region
  $region14: #{custom_model_forward.1} parent=0 // pred_check
    _
  $region15: #{custom_model_forward.1} parent=0 // pred_check_branch
    %19 = sbr.rel (0) target = $region17
  $region16: #{custom_model_forward.1} parent=0 // pred_region
    _
  $region17: #{custom_model_forward.1} parent=0 // pred_fallthru
    _
  // Predicated region
  $region18: #{custom_model_forward.1} parent=0 // pred_check
    _
  $region19: #{custom_model_forward.1} parent=0 // pred_check_branch
    %21 = sbr.rel (0) target = $region21
  $region20: #{custom_model_forward.1} parent=0 // pred_region
    _
  $region21: #{custom_model_forward.1} parent=0 // pred_fallthru
    _
  // Predicated region
  $region22: #{custom_model_forward.1} parent=0 // pred_check
    _
  $region23: #{custom_model_forward.1} parent=0 // pred_check_branch
    %23 = sbr.rel (0) target = $region25
  $region24: #{custom_model_forward.1} parent=0 // pred_region
    _
  $region25: #{custom_model_forward.1} parent=0 // pred_fallthru
    _
  // Predicated region
  $region26: #{custom_model_forward.1} parent=0 // pred_check
    _
  $region27: #{custom_model_forward.1} parent=0 // pred_check_branch
    %25 = sbr.rel (0) target = $region29
  $region28: #{custom_model_forward.1} parent=0 // pred_region
    _
  $region29: #{custom_model_forward.1} parent=0 // pred_fallthru
    _
  %v27 = vld [vmem:[%s3] sm:$0xff]
  %v28 = vld [vmem:[%s3 + $0x8] sm:$0xff]
  %v29 = vld [vmem:[%s3 + $0x10] sm:$0xff]
  %v30 = vld [vmem:[%s3 + $0x18] sm:$0xff]
  %v31 = vld [vmem:[%s3 + $0x20] sm:$0xff]
  %v32 = vld [vmem:[%s3 + $0x28] sm:$0xff]
  %v33 = vld [vmem:[%s4] sm:$0xff]
  %v34 = vld [vmem:[%s4 + $0x8] sm:$0xff]
  %v35 = vld [vmem:[%s4 + $0x10] sm:$0xff]
  %v36 = vld [vmem:[%s4 + $0x18] sm:$0xff]
  %v37 = vld [vmem:[%s4 + $0x20] sm:$0xff]
  %v38 = vld [vmem:[%s4 + $0x28] sm:$0xff]
  %v39 = vld [vmem:[%s4 + $0x30] sm:$0xff]
  %v40 = vld [vmem:[%s4 + $0x38] sm:$0xff]
  %v41 = vld [vmem:[%s4 + $0x40] sm:$0xff]
  %v42 = vld [vmem:[%s4 + $0x48] sm:$0xff]
  %v43 = vld [vmem:[%s4 + $0x50] sm:$0xff]
  %v44 = vld [vmem:[%s4 + $0x58] sm:$0xff]
  %v45 = vld [vmem:[%s4 + $0x60] sm:$0xff]
  %v46 = vld [vmem:[%s4 + $0x68] sm:$0xff]
  %v47 = vld [vmem:[%s4 + $0x70] sm:$0xff]
  %v48 = vld [vmem:[%s4 + $0x78] sm:$0xff]
  %v49 = vld [vmem:[%s4 + $0x80] sm:$0xff]
  %v50 = vld [vmem:[%s4 + $0x88] sm:$0xff]
  %v51 = vld [vmem:[%s4 + $0x90] sm:$0xff]
  %v52 = vld [vmem:[%s4 + $0x98] sm:$0xff]
  %v53 = vld [vmem:[%s4 + $0xa0] sm:$0xff]
  %v54 = vld [vmem:[%s4 + $0xa8] sm:$0xff]
  %v55 = vld [vmem:[%s4 + $0xb0] sm:$0xff]
  %v56 = vld [vmem:[%s4 + $0xb8] sm:$0xff]
  %v57 = vld [vmem:[%s4 + $0xc0] sm:$0xff]
  %v58 = vld [vmem:[%s4 + $0xc8] sm:$0xff]
  %v59 = vld [vmem:[%s4 + $0xd0] sm:$0xff]
  %v60 = vld [vmem:[%s4 + $0xd8] sm:$0xff]
  %v61 = vld [vmem:[%s4 + $0xe0] sm:$0xff]
  %v62 = vld [vmem:[%s4 + $0xe8] sm:$0xff]
  %v63 = vld [vmem:[%s4 + $0xf0] sm:$0xff]
  %v64 = vld [vmem:[%s4 + $0xf8] sm:$0xff]
  %v65 = vld [vmem:[%s4 + $0x100] sm:$0xff]
  %v66 = vld [vmem:[%s4 + $0x108] sm:$0xff]
  %v67 = vld [vmem:[%s4 + $0x110] sm:$0xff]
  %v68 = vld [vmem:[%s4 + $0x118] sm:$0xff]
  %v69 = vld [vmem:[%s4 + $0x120] sm:$0xff]
  %v70 = vld [vmem:[%s4 + $0x128] sm:$0xff]
  %v71 = vld [vmem:[%s4 + $0x130] sm:$0xff]
  %v72 = vld [vmem:[%s4 + $0x138] sm:$0xff]
  %v73 = vld [vmem:[%s4 + $0x140] sm:$0xff]
  %v74 = vld [vmem:[%s4 + $0x148] sm:$0xff]
  %v75 = vld [vmem:[%s4 + $0x150] sm:$0xff]
  %v76 = vld [vmem:[%s4 + $0x158] sm:$0xff]
  %v77 = vld [vmem:[%s4 + $0x160] sm:$0xff]
  %v78 = vld [vmem:[%s4 + $0x168] sm:$0xff]
  %v79 = vld [vmem:[%s4 + $0x170] sm:$0xff]
  %v80 = vld [vmem:[%s4 + $0x178] sm:$0xff]
  %v81 = vld [vmem:[%s4 + $0x180] sm:$0xff]
  %v82 = vld [vmem:[%s4 + $0x188] sm:$0xff]
  %v83 = vld [vmem:[%s4 + $0x190] sm:$0xff]
  %v84 = vld [vmem:[%s4 + $0x198] sm:$0xff]
  %v85 = vld [vmem:[%s4 + $0x1a0] sm:$0xff]
  %v86 = vld [vmem:[%s4 + $0x1a8] sm:$0xff]
  %v87 = vld [vmem:[%s4 + $0x1b0] sm:$0xff]
  %v88 = vld [vmem:[%s4 + $0x1b8] sm:$0xff]
  %v89 = vld [vmem:[%s4 + $0x1c0] sm:$0xff]
  %v90 = vld [vmem:[%s4 + $0x1c8] sm:$0xff]
  %v91 = vld [vmem:[%s4 + $0x1d0] sm:$0xff]
  %v92 = vld [vmem:[%s4 + $0x1d8] sm:$0xff]
  %v93 = vld [vmem:[%s4 + $0x1e0] sm:$0xff]
  %v94 = vld [vmem:[%s4 + $0x1e8] sm:$0xff]
  %v95 = vld [vmem:[%s4 + $0x1f0] sm:$0xff]
  %v96 = vld [vmem:[%s4 + $0x1f8] sm:$0xff]
  %v97 = vld [vmem:[%s4 + $0x200] sm:$0xff]
  %v98 = vld [vmem:[%s4 + $0x208] sm:$0xff]
  %v99 = vld [vmem:[%s4 + $0x210] sm:$0xff]
  %v100 = vld [vmem:[%s4 + $0x218] sm:$0xff]
  %v101 = vld [vmem:[%s4 + $0x220] sm:$0xff]
  %v102 = vld [vmem:[%s4 + $0x228] sm:$0xff]
  %v103 = vld [vmem:[%s4 + $0x230] sm:$0xff]
  %v104 = vld [vmem:[%s4 + $0x238] sm:$0xff]
  %v105 = vld [vmem:[%s4 + $0x240] sm:$0xff]
  %v106 = vld [vmem:[%s4 + $0x248] sm:$0xff]
  %v107 = vld [vmem:[%s4 + $0x250] sm:$0xff]
  %v108 = vld [vmem:[%s4 + $0x258] sm:$0xff]
  %v109 = vld [vmem:[%s4 + $0x260] sm:$0xff]
  %v110 = vld [vmem:[%s4 + $0x268] sm:$0xff]
  %v111 = vld [vmem:[%s4 + $0x270] sm:$0xff]
  %v112 = vld [vmem:[%s4 + $0x278] sm:$0xff]
  %v113 = vld [vmem:[%s5] sm:$0xf]
  %v114 = vld [vmem:[%s5 + $0x4] sm:$0xf]
  %v115 = vld [vmem:[%s5 + $0x8] sm:$0xf]
  %v116 = vld [vmem:[%s5 + $0xc] sm:$0xf]
  %v117 = vld [vmem:[%s5 + $0x10] sm:$0xf]
  %v118 = vld [vmem:[%s5 + $0x14] sm:$0xf]
  %v119 = vld [vmem:[%s5 + $0x18] sm:$0xf]
  %v120 = vld [vmem:[%s5 + $0x1c] sm:$0xf]
  %v121 = vld [vmem:[%s5 + $0x20] sm:$0xf]
  %v122 = vld [vmem:[%s5 + $0x24] sm:$0xf]
  %v123 = vld [vmem:[%s5 + $0x28] sm:$0xf]
  %v124 = vld [vmem:[%s5 + $0x2c] sm:$0xf]
  %v125 = vld [vmem:[%s5 + $0x30] sm:$0xf]
  %v126 = vld [vmem:[%s5 + $0x34] sm:$0xf]
  %v127 = vld [vmem:[%s5 + $0x38] sm:$0xf]
  %v128 = vld [vmem:[%s5 + $0x3c] sm:$0xf]
  %v129 = vld [vmem:[%s5 + $0x40] sm:$0xf]
  %v130 = vld [vmem:[%s5 + $0x44] sm:$0xf]
  %v131 = vld [vmem:[%s5 + $0x48] sm:$0xf]
  %v132 = vld [vmem:[%s5 + $0x4c] sm:$0xf]
  %v133 = vld [vmem:[%s5 + $0x50] sm:$0xf]
  %v134 = vld [vmem:[%s5 + $0x54] sm:$0xf]
  %v135 = vld [vmem:[%s5 + $0x58] sm:$0xf]
  %v136 = vld [vmem:[%s5 + $0x5c] sm:$0xf]
  %v137 = vld [vmem:[%s5 + $0x60] sm:$0xf]
  %v138 = vld [vmem:[%s5 + $0x64] sm:$0xf]
  %v139 = vld [vmem:[%s5 + $0x68] sm:$0xf]
  %v140 = vld [vmem:[%s5 + $0x6c] sm:$0xf]
  %v141 = vld [vmem:[%s5 + $0x70] sm:$0xf]
  %v142 = vld [vmem:[%s5 + $0x74] sm:$0xf]
  %v143 = vld [vmem:[%s5 + $0x78] sm:$0xf]
  %v144 = vld [vmem:[%s5 + $0x7c] sm:$0xf]
  %v145 = vld [vmem:[%s5 + $0x80] sm:$0xf]
  %v146 = vld [vmem:[%s5 + $0x84] sm:$0xf]
  %v147 = vld [vmem:[%s5 + $0x88] sm:$0xf]
  %v148 = vld [vmem:[%s5 + $0x8c] sm:$0xf]
  %v149 = vld [vmem:[%s5 + $0x90] sm:$0xf]
  %v150 = vld [vmem:[%s5 + $0x94] sm:$0xf]
  %v151 = vld [vmem:[%s5 + $0x98] sm:$0xf]
  %v152 = vld [vmem:[%s5 + $0x9c] sm:$0xf]
  %v153 = vld [vmem:[%s5 + $0xa0] sm:$0xf]
  %v154 = vld [vmem:[%s5 + $0xa4] sm:$0xf]
  %v155 = vld [vmem:[%s5 + $0xa8] sm:$0xf]
  %v156 = vld [vmem:[%s5 + $0xac] sm:$0xf]
  %v157 = vld [vmem:[%s5 + $0xb0] sm:$0xf]
  %v158 = vld [vmem:[%s5 + $0xb4] sm:$0xf]
  %v159 = vld [vmem:[%s5 + $0xb8] sm:$0xf]
  %v160 = vld [vmem:[%s5 + $0xbc] sm:$0xf]
  %v161 = vld [vmem:[%s5 + $0xc0] sm:$0xf]
  %v162 = vld [vmem:[%s5 + $0xc4] sm:$0xf]
  %v163 = vld [vmem:[%s5 + $0xc8] sm:$0xf]
  %v164 = vld [vmem:[%s5 + $0xcc] sm:$0xf]
  %v165 = vld [vmem:[%s5 + $0xd0] sm:$0xf]
  %v166 = vld [vmem:[%s5 + $0xd4] sm:$0xf]
  %v167 = vld [vmem:[%s5 + $0xd8] sm:$0xf]
  %v168 = vld [vmem:[%s5 + $0xdc] sm:$0xf]
  %v169 = vld [vmem:[%s5 + $0xe0] sm:$0xf]
  %v170 = vld [vmem:[%s5 + $0xe4] sm:$0xf]
  %v171 = vld [vmem:[%s5 + $0xe8] sm:$0xf]
  %v172 = vld [vmem:[%s5 + $0xec] sm:$0xf]
  %v173 = vld [vmem:[%s5 + $0xf0] sm:$0xf]
  %v174 = vld [vmem:[%s5 + $0xf4] sm:$0xf]
  %v175 = vld [vmem:[%s5 + $0xf8] sm:$0xf]
  %v176 = vld [vmem:[%s5 + $0xfc] sm:$0xf]
  %v177 = vld [vmem:[%s6] sm:$0xf]
  %v178 = vld [vmem:[%s6 + $0x4] sm:$0xf]
  %v179 = vld [vmem:[%s6 + $0x8] sm:$0xf]
  %v180 = vld [vmem:[%s6 + $0xc] sm:$0xf]
  %v181 = vld [vmem:[%s6 + $0x10] sm:$0xf]
  %v182 = vld [vmem:[%s6 + $0x14] sm:$0xf]
  %v183 = vld [vmem:[%s6 + $0x18] sm:$0xf]
  %v184 = vld [vmem:[%s6 + $0x1c] sm:$0xf]
  %v185 = vld [vmem:[%s6 + $0x20] sm:$0xf]
  %v186 = vld [vmem:[%s6 + $0x24] sm:$0xf]
  %v187 = vld [vmem:[%s6 + $0x28] sm:$0xf]
  %v188 = vld [vmem:[%s6 + $0x2c] sm:$0xf]
  %v189 = vld [vmem:[%s6 + $0x30] sm:$0xf]
  %v190 = vld [vmem:[%s6 + $0x34] sm:$0xf]
  %v191 = vld [vmem:[%s6 + $0x38] sm:$0xf]
  %v192 = vld [vmem:[%s6 + $0x3c] sm:$0xf]
  %v193 = vld [vmem:[%s6 + $0x40] sm:$0xf]
  %v194 = vld [vmem:[%s6 + $0x44] sm:$0xf]
  %v195 = vld [vmem:[%s6 + $0x48] sm:$0xf]
  %v196 = vld [vmem:[%s6 + $0x4c] sm:$0xf]
  %v197 = vld [vmem:[%s6 + $0x50] sm:$0xf]
  %v198 = vld [vmem:[%s6 + $0x54] sm:$0xf]
  %v199 = vld [vmem:[%s6 + $0x58] sm:$0xf]
  %v200 = vld [vmem:[%s6 + $0x5c] sm:$0xf]
  %v201 = vld [vmem:[%s6 + $0x60] sm:$0xf]
  %v202 = vld [vmem:[%s6 + $0x64] sm:$0xf]
  %v203 = vld [vmem:[%s6 + $0x68] sm:$0xf]
  %v204 = vld [vmem:[%s6 + $0x6c] sm:$0xf]
  %v205 = vld [vmem:[%s2] ss:$0 sm:$0xff]
  %s206 = scalar_lea.vmem %s2, 1
  %v207 = vld [vmem:[%s206] ss:$8 sm:$0xf]
  %s208 = scalar_lea.vmem %s2, 2
  %v209 = vld [vmem:[%s208] ss:$8 sm:$0x3]
  %v210 = vld [vmem:[%s2 + $0x3] ss:$0 sm:$0xff]
  %v211 = vld [vmem:[%s2 + $0x4] ss:$0 sm:$0xff]
  %v212 = vld [vmem:[%s2 + $0x5] ss:$0 sm:$0xff]
  %s213 = scalar_lea.vmem %s2, 6
  %v214 = vld [vmem:[%s213] ss:$8 sm:$0x3]
  %v215 = vld [vmem:[%s2 + $0x7] ss:$0 sm:$0xff]
  %v216 = vld [vmem:[%s0] sm:$0xf]
  %v217 = vld [vmem:[%s0 + $0x4] sm:$0xf]
  %v218 = vld [vmem:[%s0 + $0x8] sm:$0xf]
  %v219 = vld [vmem:[%s0 + $0xc] sm:$0xf]
  %v220 = vld [vmem:[%s0 + $0x10] sm:$0xf]
  %v221 = vld [vmem:[%s0 + $0x14] sm:$0xf]
  %v222 = vld [vmem:[%s0 + $0x18] sm:$0xf]
  %v223 = vld [vmem:[%s0 + $0x1c] sm:$0xf]
  %v224 = vld [vmem:[%s0 + $0x20] sm:$0xf]
  %v225 = vld [vmem:[%s0 + $0x24] sm:$0xf]
  %v226 = vld [vmem:[%s0 + $0x28] sm:$0xf]
  %v227 = vld [vmem:[%s0 + $0x2c] sm:$0xf]
  %v228 = vld [vmem:[%s0 + $0x30] sm:$0xf]
  %v229 = vld [vmem:[%s0 + $0x34] sm:$0xf]
  %v230 = vld [vmem:[%s0 + $0x38] sm:$0xf]
  %v231 = vld [vmem:[%s0 + $0x3c] sm:$0xf]
  %v232 = vld [vmem:[%s0 + $0x40] sm:$0xf]
  %v233 = vld [vmem:[%s0 + $0x44] sm:$0xf]
  %v234 = vld [vmem:[%s0 + $0x48] sm:$0xf]
  %v235 = vld [vmem:[%s0 + $0x4c] sm:$0xf]
  %v236 = vld [vmem:[%s0 + $0x50] sm:$0xf]
  %v237 = vld [vmem:[%s0 + $0x54] sm:$0xf]
  %v238 = vld [vmem:[%s0 + $0x58] sm:$0xf]
  %v239 = vld [vmem:[%s0 + $0x5c] sm:$0xf]
  %v240 = vld [vmem:[%s0 + $0x60] sm:$0xf]
  %v241 = vld [vmem:[%s0 + $0x64] sm:$0xf]
  %v242 = vld [vmem:[%s0 + $0x68] sm:$0xf]
  %v243 = vld [vmem:[%s0 + $0x6c] sm:$0xf]
  %v244 = vld [vmem:[%s0 + $0x70] sm:$0xf]
  %v245 = vld [vmem:[%s0 + $0x74] sm:$0xf]
  %v246 = vld [vmem:[%s0 + $0x78] sm:$0xf]
  %v247 = vld [vmem:[%s0 + $0x7c] sm:$0xf]
  %v248 = vld [vmem:[%s0 + $0x80] sm:$0xf]
  %v249 = vld [vmem:[%s0 + $0x84] sm:$0xf]
  %v250 = vld [vmem:[%s0 + $0x88] sm:$0xf]
  %v251 = vld [vmem:[%s0 + $0x8c] sm:$0xf]
  %v252 = vld [vmem:[%s0 + $0x90] sm:$0xf]
  %v253 = vld [vmem:[%s0 + $0x94] sm:$0xf]
  %v254 = vld [vmem:[%s0 + $0x98] sm:$0xf]
  %v255 = vld [vmem:[%s0 + $0x9c] sm:$0xf]
  %v256 = vld [vmem:[%s0 + $0xa0] sm:$0xf]
  %v257 = vld [vmem:[%s0 + $0xa4] sm:$0xf]
  %v258 = vld [vmem:[%s0 + $0xa8] sm:$0xf]
  %v259 = vld [vmem:[%s0 + $0xac] sm:$0xf]
  %v260 = vld [vmem:[%s0 + $0xb0] sm:$0xf]
  %v261 = vld [vmem:[%s0 + $0xb4] sm:$0xf]
  %v262 = vld [vmem:[%s0 + $0xb8] sm:$0xf]
  %v263 = vld [vmem:[%s0 + $0xbc] sm:$0xf]
  %v264 = vld [vmem:[%s0 + $0xc0] sm:$0xf]
  %v265 = vld [vmem:[%s0 + $0xc4] sm:$0xf]
  %v266 = vld [vmem:[%s0 + $0xc8] sm:$0xf]
  %v267 = vld [vmem:[%s0 + $0xcc] sm:$0xf]
  %v268 = vld [vmem:[%s0 + $0xd0] sm:$0xf]
  %v269 = vld [vmem:[%s0 + $0xd4] sm:$0xf]
  %v270 = vld [vmem:[%s0 + $0xd8] sm:$0xf]
  %v271 = vld [vmem:[%s0 + $0xdc] sm:$0xf]
  %v272 = vld [vmem:[%s0 + $0xe0] sm:$0xf]
  %v273 = vld [vmem:[%s0 + $0xe4] sm:$0xf]
  %v274 = vld [vmem:[%s0 + $0xe8] sm:$0xf]
  %v275 = vld [vmem:[%s0 + $0xec] sm:$0xf]
  %v276 = vld [vmem:[%s0 + $0xf0] sm:$0xf]
  %v277 = vld [vmem:[%s0 + $0xf4] sm:$0xf]
  %v278 = vld [vmem:[%s0 + $0xf8] sm:$0xf]
  %v279 = vld [vmem:[%s0 + $0xfc] sm:$0xf]
  %v344 = vunpack.c.l.b16 %v216
  %v345 = vunpack.c.l.b16 %v217
  %v346 = vunpack.c.l.b16 %v218
  %v347 = vunpack.c.l.b16 %v219
  %v348 = vunpack.c.l.b16 %v220
  %v349 = vunpack.c.l.b16 %v221
  %v350 = vunpack.c.l.b16 %v222
  %v351 = vunpack.c.l.b16 %v223
  %v352 = vunpack.c.l.b16 %v224
  %v353 = vunpack.c.l.b16 %v225
  %v354 = vunpack.c.l.b16 %v226
  %v355 = vunpack.c.l.b16 %v227
  %v356 = vunpack.c.l.b16 %v228
  %v357 = vunpack.c.l.b16 %v229
  %v358 = vunpack.c.l.b16 %v230
  %v359 = vunpack.c.l.b16 %v231
  %v360 = vunpack.c.l.b16 %v232
  %v361 = vunpack.c.l.b16 %v233
  %v362 = vunpack.c.l.b16 %v234
  %v363 = vunpack.c.l.b16 %v235
  %v364 = vunpack.c.l.b16 %v236
  %v365 = vunpack.c.l.b16 %v237
  %v366 = vunpack.c.l.b16 %v238
  %v367 = vunpack.c.l.b16 %v239
  %v368 = vunpack.c.l.b16 %v240
  %v369 = vunpack.c.l.b16 %v241
  %v370 = vunpack.c.l.b16 %v242
  %v371 = vunpack.c.l.b16 %v243
  %v372 = vunpack.c.l.b16 %v244
  %v373 = vunpack.c.l.b16 %v245
  %v374 = vunpack.c.l.b16 %v246
  %v375 = vunpack.c.l.b16 %v247
  %v376 = vunpack.c.l.b16 %v248
  %v377 = vunpack.c.l.b16 %v249
  %v378 = vunpack.c.l.b16 %v250
  %v379 = vunpack.c.l.b16 %v251
  %v380 = vunpack.c.l.b16 %v252
  %v381 = vunpack.c.l.b16 %v253
  %v382 = vunpack.c.l.b16 %v254
  %v383 = vunpack.c.l.b16 %v255
  %v384 = vunpack.c.l.b16 %v256
  %v385 = vunpack.c.l.b16 %v257
  %v386 = vunpack.c.l.b16 %v258
  %v387 = vunpack.c.l.b16 %v259
  %v388 = vunpack.c.l.b16 %v260
  %v389 = vunpack.c.l.b16 %v261
  %v390 = vunpack.c.l.b16 %v262
  %v391 = vunpack.c.l.b16 %v263
  %v392 = vunpack.c.l.b16 %v264
  %v393 = vunpack.c.l.b16 %v265
  %v394 = vunpack.c.l.b16 %v266
  %v395 = vunpack.c.l.b16 %v267
  %v396 = vunpack.c.l.b16 %v268
  %v397 = vunpack.c.l.b16 %v269
  %v398 = vunpack.c.l.b16 %v270
  %v399 = vunpack.c.l.b16 %v271
  %v400 = vunpack.c.l.b16 %v272
  %v401 = vunpack.c.l.b16 %v273
  %v402 = vunpack.c.l.b16 %v274
  %v403 = vunpack.c.l.b16 %v275
  %v404 = vunpack.c.l.b16 %v276
  %v405 = vunpack.c.l.b16 %v277
  %v406 = vunpack.c.l.b16 %v278
  %v407 = vunpack.c.l.b16 %v279
  %v408 = vpack.c.b16 %v345, %v344
  %v409 = vpack.c.b16 %v347, %v346
  %v410 = vpack.c.b16 %v349, %v348
  %v411 = vpack.c.b16 %v351, %v350
  %v412 = vpack.c.b16 %v353, %v352
  %v413 = vpack.c.b16 %v355, %v354
  %v414 = vpack.c.b16 %v357, %v356
  %v415 = vpack.c.b16 %v359, %v358
  %v416 = vpack.c.b16 %v361, %v360
  %v417 = vpack.c.b16 %v363, %v362
  %v418 = vpack.c.b16 %v365, %v364
  %v419 = vpack.c.b16 %v367, %v366
  %v420 = vpack.c.b16 %v369, %v368
  %v421 = vpack.c.b16 %v371, %v370
  %v422 = vpack.c.b16 %v373, %v372
  %v423 = vpack.c.b16 %v375, %v374
  %v424 = vpack.c.b16 %v377, %v376
  %v425 = vpack.c.b16 %v379, %v378
  %v426 = vpack.c.b16 %v381, %v380
  %v427 = vpack.c.b16 %v383, %v382
  %v428 = vpack.c.b16 %v385, %v384
  %v429 = vpack.c.b16 %v387, %v386
  %v430 = vpack.c.b16 %v389, %v388
  %v431 = vpack.c.b16 %v391, %v390
  %v432 = vpack.c.b16 %v393, %v392
  %v433 = vpack.c.b16 %v395, %v394
  %v434 = vpack.c.b16 %v397, %v396
  %v435 = vpack.c.b16 %v399, %v398
  %v436 = vpack.c.b16 %v401, %v400
  %v437 = vpack.c.b16 %v403, %v402
  %v438 = vpack.c.b16 %v405, %v404
  %v439 = vpack.c.b16 %v407, %v406
  %v444 = vunpack.c.l.b16 %v201
  %v445 = vunpack.c.l.b16 %v202
  %v446 = vunpack.c.l.b16 %v203
  %v447 = vunpack.c.l.b16 %v204
  %v448 = vpack.c.b16 %v445, %v444
  %v449 = vpack.c.b16 %v447, %v446
  %vm452 = vcmask 261120
  %v454 = vsel %vm452, %v408, 0
  %v457 = vsel %vm452, %v409, 0
  %v460 = vsel %vm452, %v410, 0
  %v463 = vsel %vm452, %v411, 0
  %v466 = vsel %vm452, %v412, 0
  %v469 = vsel %vm452, %v413, 0
  %v472 = vsel %vm452, %v414, 0
  %v475 = vsel %vm452, %v415, 0
  %v478 = vsel %vm452, %v416, 0
  %v481 = vsel %vm452, %v417, 0
  %v484 = vsel %vm452, %v418, 0
  %v487 = vsel %vm452, %v419, 0
  %v490 = vsel %vm452, %v420, 0
  %v493 = vsel %vm452, %v421, 0
  %v496 = vsel %vm452, %v422, 0
  %v499 = vsel %vm452, %v423, 0
  %v502 = vsel %vm452, %v424, 0
  %v505 = vsel %vm452, %v425, 0
  %v508 = vsel %vm452, %v426, 0
  %v511 = vsel %vm452, %v427, 0
  %v514 = vsel %vm452, %v428, 0
  %v517 = vsel %vm452, %v429, 0
  %v520 = vsel %vm452, %v430, 0
  %v523 = vsel %vm452, %v431, 0
  %v526 = vsel %vm452, %v432, 0
  %v529 = vsel %vm452, %v433, 0
  %v532 = vsel %vm452, %v434, 0
  %v535 = vsel %vm452, %v435, 0
  %v538 = vsel %vm452, %v436, 0
  %v541 = vsel %vm452, %v437, 0
  %v544 = vsel %vm452, %v438, 0
  %v547 = vsel %vm452, %v439, 0
  %549 = vmatprep.subr.bf16.mxu0 0
  %550 = vmatpush1.bf16.msra.mxu0 %v448
  %551 = vmatprep.subr.bf16.mxu0 0
  %552 = vmatpush1.bf16.msra.mxu0 %v449
  %553 = vmatprep.subr.bf16.mxu0 0
  %554 = vmatpush1.bf16.msra.mxu0 0
  %555 = vmatprep.subr.bf16.mxu0 0
  %556 = vmatpush1.bf16.msra.mxu0 0
  %557 = vmatprep.subr.bf16.mxu0 0
  %558 = vmatpush1.bf16.msra.mxu0 0
  %559 = vmatprep.subr.bf16.mxu0 0
  %560 = vmatpush1.bf16.msra.mxu0 0
  %561 = vmatprep.subr.bf16.mxu0 0
  %562 = vmatpush1.bf16.msra.mxu0 0
  %563 = vmatprep.subr.bf16.mxu0 0
  %564 = vmatpush1.bf16.msra.mxu0 0
  %565 = vmatprep.subr.bf16.mxu0 0
  %566 = vmatpush1.bf16.msra.mxu0 0
  %567 = vmatprep.subr.bf16.mxu0 0
  %568 = vmatpush1.bf16.msra.mxu0 0
  %569 = vmatprep.subr.bf16.mxu0 0
  %570 = vmatpush1.bf16.msra.mxu0 0
  %571 = vmatprep.subr.bf16.mxu0 0
  %572 = vmatpush1.bf16.msra.mxu0 0
  %573 = vmatprep.subr.bf16.mxu0 0
  %574 = vmatpush1.bf16.msra.mxu0 0
  %575 = vmatprep.subr.bf16.mxu0 0
  %576 = vmatpush1.bf16.msra.mxu0 0
  %577 = vmatprep.subr.bf16.mxu0 0
  %578 = vmatpush1.bf16.msra.mxu0 0
  %579 = vmatprep.subr.bf16.mxu0 0
  %580 = vmatpush1.bf16.msra.mxu0 0
  %581 = vmatprep.mubr.bf16.mxu0 0
  %582 = vmatmul.mubr.bf16.gmra.mrb[0].mxu0 %v454
  %v583 = vpop.f32.mrb[0].mxu0
  %v584 = vadd.f32 %v205, %v583
  %v585 = vpop.f32.mrb[0].mxu0
  %v586 = vpop.f32.mrb[0].mxu0
  %v587 = vadd.f32 %v205, %v586
  %v588 = vpop.f32.mrb[0].mxu0
  %589 = vmatprep.mubr.bf16.mxu0 0
  %590 = vmatmul.mubr.bf16.gmra.mrb[0].mxu0 %v457
  %v591 = vpop.f32.mrb[0].mxu0
  %v592 = vadd.f32 %v205, %v591
  %v593 = vpop.f32.mrb[0].mxu0
  %v594 = vpop.f32.mrb[0].mxu0
  %v595 = vadd.f32 %v205, %v594
  %v596 = vpop.f32.mrb[0].mxu0
  %597 = vmatprep.mubr.bf16.mxu0 0
  %598 = vmatmul.mubr.bf16.gmra.mrb[0].mxu0 %v460
  %v599 = vpop.f32.mrb[0].mxu0
  %v600 = vadd.f32 %v205, %v599
  %v601 = vpop.f32.mrb[0].mxu0
  %v602 = vpop.f32.mrb[0].mxu0
  %v603 = vadd.f32 %v205, %v602
  %v604 = vpop.f32.mrb[0].mxu0
  %605 = vmatprep.mubr.bf16.mxu0 0
  %606 = vmatmul.mubr.bf16.gmra.mrb[0].mxu0 %v463
  %v607 = vpop.f32.mrb[0].mxu0
  %v608 = vadd.f32 %v205, %v607
  %v609 = vpop.f32.mrb[0].mxu0
  %v610 = vpop.f32.mrb[0].mxu0
  %v611 = vadd.f32 %v205, %v610
  %v612 = vpop.f32.mrb[0].mxu0
  %613 = vmatprep.mubr.bf16.mxu0 0
  %614 = vmatmul.mubr.bf16.gmra.mrb[0].mxu0 %v466
  %v615 = vpop.f32.mrb[0].mxu0
  %v616 = vadd.f32 %v205, %v615
  %v617 = vpop.f32.mrb[0].mxu0
  %v618 = vpop.f32.mrb[0].mxu0
  %v619 = vadd.f32 %v205, %v618
  %v620 = vpop.f32.mrb[0].mxu0
  %621 = vmatprep.mubr.bf16.mxu0 0
  %622 = vmatmul.mubr.bf16.gmra.mrb[0].mxu0 %v469
  %v623 = vpop.f32.mrb[0].mxu0
  %v624 = vadd.f32 %v205, %v623
  %v625 = vpop.f32.mrb[0].mxu0
  %v626 = vpop.f32.mrb[0].mxu0
  %v627 = vadd.f32 %v205, %v626
  %v628 = vpop.f32.mrb[0].mxu0
  %629 = vmatprep.mubr.bf16.mxu0 0
  %630 = vmatmul.mubr.bf16.gmra.mrb[0].mxu0 %v472
  %v631 = vpop.f32.mrb[0].mxu0
  %v632 = vadd.f32 %v205, %v631
  %v633 = vpop.f32.mrb[0].mxu0
  %v634 = vpop.f32.mrb[0].mxu0
  %v635 = vadd.f32 %v205, %v634
  %v636 = vpop.f32.mrb[0].mxu0
  %637 = vmatprep.mubr.bf16.mxu0 0
  %638 = vmatmul.mubr.bf16.gmra.mrb[0].mxu0 %v475
  %v639 = vpop.f32.mrb[0].mxu0
  %v640 = vadd.f32 %v205, %v639
  %v641 = vpop.f32.mrb[0].mxu0
  %v642 = vpop.f32.mrb[0].mxu0
  %v643 = vadd.f32 %v205, %v642
  %v644 = vpop.f32.mrb[0].mxu0
  %645 = vmatprep.mubr.bf16.mxu0 0
  %646 = vmatmul.mubr.bf16.gmra.mrb[0].mxu0 %v478
  %v647 = vpop.f32.mrb[0].mxu0
  %v648 = vadd.f32 %v205, %v647
  %v649 = vpop.f32.mrb[0].mxu0
  %v650 = vpop.f32.mrb[0].mxu0
  %v651 = vadd.f32 %v205, %v650
  %v652 = vpop.f32.mrb[0].mxu0
  %653 = vmatprep.mubr.bf16.mxu0 0
  %654 = vmatmul.mubr.bf16.gmra.mrb[0].mxu0 %v481
  %v655 = vpop.f32.mrb[0].mxu0
  %v656 = vadd.f32 %v205, %v655
  %v657 = vpop.f32.mrb[0].mxu0
  %v658 = vpop.f32.mrb[0].mxu0
  %v659 = vadd.f32 %v205, %v658
  %v660 = vpop.f32.mrb[0].mxu0
  %661 = vmatprep.mubr.bf16.mxu0 0
  %662 = vmatmul.mubr.bf16.gmra.mrb[0].mxu0 %v484
  %v663 = vpop.f32.mrb[0].mxu0
  %v664 = vadd.f32 %v205, %v663
  %v665 = vpop.f32.mrb[0].mxu0
  %v666 = vpop.f32.mrb[0].mxu0
  %v667 = vadd.f32 %v205, %v666
  %v668 = vpop.f32.mrb[0].mxu0
  %669 = vmatprep.mubr.bf16.mxu0 0
  %670 = vmatmul.mubr.bf16.gmra.mrb[0].mxu0 %v487
  %v671 = vpop.f32.mrb[0].mxu0
  %v672 = vadd.f32 %v205, %v671
  %v673 = vpop.f32.mrb[0].mxu0
  %v674 = vpop.f32.mrb[0].mxu0
  %v675 = vadd.f32 %v205, %v674
  %v676 = vpop.f32.mrb[0].mxu0
  %677 = vmatprep.mubr.bf16.mxu0 0
  %678 = vmatmul.mubr.bf16.gmra.mrb[0].mxu0 %v490
  %v679 = vpop.f32.mrb[0].mxu0
  %v680 = vadd.f32 %v205, %v679
  %v681 = vpop.f32.mrb[0].mxu0
  %v682 = vpop.f32.mrb[0].mxu0
  %v683 = vadd.f32 %v205, %v682
  %v684 = vpop.f32.mrb[0].mxu0
  %685 = vmatprep.mubr.bf16.mxu0 0
  %686 = vmatmul.mubr.bf16.gmra.mrb[0].mxu0 %v493
  %v687 = vpop.f32.mrb[0].mxu0
  %v688 = vadd.f32 %v205, %v687
  %v689 = vpop.f32.mrb[0].mxu0
  %v690 = vpop.f32.mrb[0].mxu0
  %v691 = vadd.f32 %v205, %v690
  %v692 = vpop.f32.mrb[0].mxu0
  %693 = vmatprep.mubr.bf16.mxu0 0
  %694 = vmatmul.mubr.bf16.gmra.mrb[0].mxu0 %v496
  %v695 = vpop.f32.mrb[0].mxu0
  %v696 = vadd.f32 %v205, %v695
  %v697 = vpop.f32.mrb[0].mxu0
  %v698 = vpop.f32.mrb[0].mxu0
  %v699 = vadd.f32 %v205, %v698
  %v700 = vpop.f32.mrb[0].mxu0
  %701 = vmatprep.mubr.bf16.mxu0 0
  %702 = vmatmul.mubr.bf16.gmra.mrb[0].mxu0 %v499
  %v703 = vpop.f32.mrb[0].mxu0
  %v704 = vadd.f32 %v205, %v703
  %v705 = vpop.f32.mrb[0].mxu0
  %v706 = vpop.f32.mrb[0].mxu0
  %v707 = vadd.f32 %v205, %v706
  %v708 = vpop.f32.mrb[0].mxu0
  %709 = vmatprep.mubr.bf16.mxu0 0
  %710 = vmatmul.mubr.bf16.gmra.mrb[0].mxu0 %v502
  %v711 = vpop.f32.mrb[0].mxu0
  %v712 = vadd.f32 %v205, %v711
  %v713 = vpop.f32.mrb[0].mxu0
  %v714 = vpop.f32.mrb[0].mxu0
  %v715 = vadd.f32 %v205, %v714
  %v716 = vpop.f32.mrb[0].mxu0
  %717 = vmatprep.mubr.bf16.mxu0 0
  %718 = vmatmul.mubr.bf16.gmra.mrb[0].mxu0 %v505
  %v719 = vpop.f32.mrb[0].mxu0
  %v720 = vadd.f32 %v205, %v719
  %v721 = vpop.f32.mrb[0].mxu0
  %v722 = vpop.f32.mrb[0].mxu0
  %v723 = vadd.f32 %v205, %v722
  %v724 = vpop.f32.mrb[0].mxu0
  %725 = vmatprep.mubr.bf16.mxu0 0
  %726 = vmatmul.mubr.bf16.gmra.mrb[0].mxu0 %v508
  %v727 = vpop.f32.mrb[0].mxu0
  %v728 = vadd.f32 %v205, %v727
  %v729 = vpop.f32.mrb[0].mxu0
  %v730 = vpop.f32.mrb[0].mxu0
  %v731 = vadd.f32 %v205, %v730
  %v732 = vpop.f32.mrb[0].mxu0
  %733 = vmatprep.mubr.bf16.mxu0 0
  %734 = vmatmul.mubr.bf16.gmra.mrb[0].mxu0 %v511
  %v735 = vpop.f32.mrb[0].mxu0
  %v736 = vadd.f32 %v205, %v735
  %v737 = vpop.f32.mrb[0].mxu0
  %v738 = vpop.f32.mrb[0].mxu0
  %v739 = vadd.f32 %v205, %v738
  %v740 = vpop.f32.mrb[0].mxu0
  %741 = vmatprep.mubr.bf16.mxu0 0
  %742 = vmatmul.mubr.bf16.gmra.mrb[0].mxu0 %v514
  %v743 = vpop.f32.mrb[0].mxu0
  %v744 = vadd.f32 %v205, %v743
  %v745 = vpop.f32.mrb[0].mxu0
  %v746 = vpop.f32.mrb[0].mxu0
  %v747 = vadd.f32 %v205, %v746
  %v748 = vpop.f32.mrb[0].mxu0
  %749 = vmatprep.mubr.bf16.mxu0 0
  %750 = vmatmul.mubr.bf16.gmra.mrb[0].mxu0 %v517
  %v751 = vpop.f32.mrb[0].mxu0
  %v752 = vadd.f32 %v205, %v751
  %v753 = vpop.f32.mrb[0].mxu0
  %v754 = vpop.f32.mrb[0].mxu0
  %v755 = vadd.f32 %v205, %v754
  %v756 = vpop.f32.mrb[0].mxu0
  %757 = vmatprep.mubr.bf16.mxu0 0
  %758 = vmatmul.mubr.bf16.gmra.mrb[0].mxu0 %v520
  %v759 = vpop.f32.mrb[0].mxu0
  %v760 = vadd.f32 %v205, %v759
  %v761 = vpop.f32.mrb[0].mxu0
  %v762 = vpop.f32.mrb[0].mxu0
  %v763 = vadd.f32 %v205, %v762
  %v764 = vpop.f32.mrb[0].mxu0
  %765 = vmatprep.mubr.bf16.mxu0 0
  %766 = vmatmul.mubr.bf16.gmra.mrb[0].mxu0 %v523
  %v767 = vpop.f32.mrb[0].mxu0
  %v768 = vadd.f32 %v205, %v767
  %v769 = vpop.f32.mrb[0].mxu0
  %v770 = vpop.f32.mrb[0].mxu0
  %v771 = vadd.f32 %v205, %v770
  %v772 = vpop.f32.mrb[0].mxu0
  %773 = vmatprep.mubr.bf16.mxu0 0
  %774 = vmatmul.mubr.bf16.gmra.mrb[0].mxu0 %v526
  %v775 = vpop.f32.mrb[0].mxu0
  %v776 = vadd.f32 %v205, %v775
  %v777 = vpop.f32.mrb[0].mxu0
  %v778 = vpop.f32.mrb[0].mxu0
  %v779 = vadd.f32 %v205, %v778
  %v780 = vpop.f32.mrb[0].mxu0
  %781 = vmatprep.mubr.bf16.mxu0 0
  %782 = vmatmul.mubr.bf16.gmra.mrb[0].mxu0 %v529
  %v783 = vpop.f32.mrb[0].mxu0
  %v784 = vadd.f32 %v205, %v783
  %v785 = vpop.f32.mrb[0].mxu0
  %v786 = vpop.f32.mrb[0].mxu0
  %v787 = vadd.f32 %v205, %v786
  %v788 = vpop.f32.mrb[0].mxu0
  %789 = vmatprep.mubr.bf16.mxu0 0
  %790 = vmatmul.mubr.bf16.gmra.mrb[0].mxu0 %v532
  %v791 = vpop.f32.mrb[0].mxu0
  %v792 = vadd.f32 %v205, %v791
  %v793 = vpop.f32.mrb[0].mxu0
  %v794 = vpop.f32.mrb[0].mxu0
  %v795 = vadd.f32 %v205, %v794
  %v796 = vpop.f32.mrb[0].mxu0
  %797 = vmatprep.mubr.bf16.mxu0 0
  %798 = vmatmul.mubr.bf16.gmra.mrb[0].mxu0 %v535
  %v799 = vpop.f32.mrb[0].mxu0
  %v800 = vadd.f32 %v205, %v799
  %v801 = vpop.f32.mrb[0].mxu0
  %v802 = vpop.f32.mrb[0].mxu0
  %v803 = vadd.f32 %v205, %v802
  %v804 = vpop.f32.mrb[0].mxu0
  %805 = vmatprep.mubr.bf16.mxu0 0
  %806 = vmatmul.mubr.bf16.gmra.mrb[0].mxu0 %v538
  %v807 = vpop.f32.mrb[0].mxu0
  %v808 = vadd.f32 %v205, %v807
  %v809 = vpop.f32.mrb[0].mxu0
  %v810 = vpop.f32.mrb[0].mxu0
  %v811 = vadd.f32 %v205, %v810
  %v812 = vpop.f32.mrb[0].mxu0
  %813 = vmatprep.mubr.bf16.mxu0 0
  %814 = vmatmul.mubr.bf16.gmra.mrb[0].mxu0 %v541
  %v815 = vpop.f32.mrb[0].mxu0
  %v816 = vadd.f32 %v205, %v815
  %v817 = vpop.f32.mrb[0].mxu0
  %v818 = vpop.f32.mrb[0].mxu0
  %v819 = vadd.f32 %v205, %v818
  %v820 = vpop.f32.mrb[0].mxu0
  %821 = vmatprep.mubr.bf16.mxu0 0
  %822 = vmatmul.mubr.bf16.gmra.mrb[0].mxu0 %v544
  %v823 = vpop.f32.mrb[0].mxu0
  %v824 = vadd.f32 %v205, %v823
  %v825 = vpop.f32.mrb[0].mxu0
  %v826 = vpop.f32.mrb[0].mxu0
  %v827 = vadd.f32 %v205, %v826
  %v828 = vpop.f32.mrb[0].mxu0
  %829 = vmatprep.mubr.bf16.mxu0 0
  %830 = vmatmul.mubr.bf16.gmra.mrb[0].mxu0 %v547
  %v831 = vpop.f32.mrb[0].mxu0
  %v832 = vadd.f32 %v205, %v831
  %v833 = vpop.f32.mrb[0].mxu0
  %v834 = vpop.f32.mrb[0].mxu0
  %v835 = vadd.f32 %v205, %v834
  %v836 = vpop.f32.mrb[0].mxu0
  %837 = vdwg.mxu0
  %v838 = vmax.f32 %v584, 0.0
  %v839 = vmax.f32 %v587, 0.0
  %v840 = vmax.f32 %v592, 0.0
  %v841 = vmax.f32 %v595, 0.0
  %v842 = vmax.f32 %v600, 0.0
  %v843 = vmax.f32 %v603, 0.0
  %v844 = vmax.f32 %v608, 0.0
  %v845 = vmax.f32 %v611, 0.0
  %v846 = vmax.f32 %v616, 0.0
  %v847 = vmax.f32 %v619, 0.0
  %v848 = vmax.f32 %v624, 0.0
  %v849 = vmax.f32 %v627, 0.0
  %v850 = vmax.f32 %v632, 0.0
  %v851 = vmax.f32 %v635, 0.0
  %v852 = vmax.f32 %v640, 0.0
  %v853 = vmax.f32 %v643, 0.0
  %v854 = vmax.f32 %v648, 0.0
  %v855 = vmax.f32 %v651, 0.0
  %v856 = vmax.f32 %v656, 0.0
  %v857 = vmax.f32 %v659, 0.0
  %v858 = vmax.f32 %v664, 0.0
  %v859 = vmax.f32 %v667, 0.0
  %v860 = vmax.f32 %v672, 0.0
  %v861 = vmax.f32 %v675, 0.0
  %v862 = vmax.f32 %v680, 0.0
  %v863 = vmax.f32 %v683, 0.0
  %v864 = vmax.f32 %v688, 0.0
  %v865 = vmax.f32 %v691, 0.0
  %v866 = vmax.f32 %v696, 0.0
  %v867 = vmax.f32 %v699, 0.0
  %v868 = vmax.f32 %v704, 0.0
  %v869 = vmax.f32 %v707, 0.0
  %v870 = vmax.f32 %v712, 0.0
  %v871 = vmax.f32 %v715, 0.0
  %v872 = vmax.f32 %v720, 0.0
  %v873 = vmax.f32 %v723, 0.0
  %v874 = vmax.f32 %v728, 0.0
  %v875 = vmax.f32 %v731, 0.0
  %v876 = vmax.f32 %v736, 0.0
  %v877 = vmax.f32 %v739, 0.0
  %v878 = vmax.f32 %v744, 0.0
  %v879 = vmax.f32 %v747, 0.0
  %v880 = vmax.f32 %v752, 0.0
  %v881 = vmax.f32 %v755, 0.0
  %v882 = vmax.f32 %v760, 0.0
  %v883 = vmax.f32 %v763, 0.0
  %v884 = vmax.f32 %v768, 0.0
  %v885 = vmax.f32 %v771, 0.0
  %v886 = vmax.f32 %v776, 0.0
  %v887 = vmax.f32 %v779, 0.0
  %v888 = vmax.f32 %v784, 0.0
  %v889 = vmax.f32 %v787, 0.0
  %v890 = vmax.f32 %v792, 0.0
  %v891 = vmax.f32 %v795, 0.0
  %v892 = vmax.f32 %v800, 0.0
  %v893 = vmax.f32 %v803, 0.0
  %v894 = vmax.f32 %v808, 0.0
  %v895 = vmax.f32 %v811, 0.0
  %v896 = vmax.f32 %v816, 0.0
  %v897 = vmax.f32 %v819, 0.0
  %v898 = vmax.f32 %v824, 0.0
  %v899 = vmax.f32 %v827, 0.0
  %v900 = vmax.f32 %v832, 0.0
  %v901 = vmax.f32 %v835, 0.0
  %v902 = vpack.c.bf16 %v839, %v838
  %v903 = vpack.c.bf16 %v841, %v840
  %v904 = vpack.c.bf16 %v843, %v842
  %v905 = vpack.c.bf16 %v845, %v844
  %v906 = vpack.c.bf16 %v847, %v846
  %v907 = vpack.c.bf16 %v849, %v848
  %v908 = vpack.c.bf16 %v851, %v850
  %v909 = vpack.c.bf16 %v853, %v852
  %v910 = vpack.c.bf16 %v855, %v854
  %v911 = vpack.c.bf16 %v857, %v856
  %v912 = vpack.c.bf16 %v859, %v858
  %v913 = vpack.c.bf16 %v861, %v860
  %v914 = vpack.c.bf16 %v863, %v862
  %v915 = vpack.c.bf16 %v865, %v864
  %v916 = vpack.c.bf16 %v867, %v866
  %v917 = vpack.c.bf16 %v869, %v868
  %v918 = vpack.c.bf16 %v871, %v870
  %v919 = vpack.c.bf16 %v873, %v872
  %v920 = vpack.c.bf16 %v875, %v874
  %v921 = vpack.c.bf16 %v877, %v876
  %v922 = vpack.c.bf16 %v879, %v878
  %v923 = vpack.c.bf16 %v881, %v880
  %v924 = vpack.c.bf16 %v883, %v882
  %v925 = vpack.c.bf16 %v885, %v884
  %v926 = vpack.c.bf16 %v887, %v886
  %v927 = vpack.c.bf16 %v889, %v888
  %v928 = vpack.c.bf16 %v891, %v890
  %v929 = vpack.c.bf16 %v893, %v892
  %v930 = vpack.c.bf16 %v895, %v894
  %v931 = vpack.c.bf16 %v897, %v896
  %v932 = vpack.c.bf16 %v899, %v898
  %v933 = vpack.c.bf16 %v901, %v900
  %v936 = vunpack.c.l.b16 %v31
  %v937 = vunpack.c.h.b16 %v31
  %v938 = vunpack.c.l.b16 %v32
  %v939 = vunpack.c.h.b16 %v32
  %v940 = vpack.c.b16 %v936, %v936
  %v941 = vpack.c.b16 %v937, %v937
  %v942 = vpack.c.b16 %v938, %v938
  %v943 = vpack.c.b16 %v939, %v939
  %948 = vmatprep.subr.bf16.mxu0 0
  %949 = vmatpush1.bf16.msra.mxu0 %v902
  %950 = vmatprep.subr.bf16.mxu0 0
  %951 = vmatpush1.bf16.msra.mxu0 %v903
  %952 = vmatprep.subr.bf16.mxu0 0
  %953 = vmatpush1.bf16.msra.mxu0 %v904
  %954 = vmatprep.subr.bf16.mxu0 0
  %955 = vmatpush1.bf16.msra.mxu0 %v905
  %956 = vmatprep.subr.bf16.mxu0 0
  %957 = vmatpush1.bf16.msra.mxu0 %v906
  %958 = vmatprep.subr.bf16.mxu0 0
  %959 = vmatpush1.bf16.msra.mxu0 %v907
  %960 = vmatprep.subr.bf16.mxu0 0
  %961 = vmatpush1.bf16.msra.mxu0 %v908
  %962 = vmatprep.subr.bf16.mxu0 0
  %963 = vmatpush1.bf16.msra.mxu0 %v909
  %964 = vmatprep.subr.bf16.mxu0 0
  %965 = vmatpush1.bf16.msra.mxu0 %v910
  %966 = vmatprep.subr.bf16.mxu0 0
  %967 = vmatpush1.bf16.msra.mxu0 %v911
  %968 = vmatprep.subr.bf16.mxu0 0
  %969 = vmatpush1.bf16.msra.mxu0 %v912
  %970 = vmatprep.subr.bf16.mxu0 0
  %971 = vmatpush1.bf16.msra.mxu0 %v913
  %972 = vmatprep.subr.bf16.mxu0 0
  %973 = vmatpush1.bf16.msra.mxu0 %v914
  %974 = vmatprep.subr.bf16.mxu0 0
  %975 = vmatpush1.bf16.msra.mxu0 %v915
  %976 = vmatprep.subr.bf16.mxu0 0
  %977 = vmatpush1.bf16.msra.mxu0 %v916
  %978 = vmatprep.subr.bf16.mxu0 0
  %979 = vmatpush1.bf16.msra.mxu0 %v917
  %980 = vmatprep.mubr.bf16.mxu0 %v941
  %981 = vmatmul.mubr.bf16.gmra.mrb[0].mxu0 %v940
  %v982 = vpop.f32.mrb[0].mxu0
  %v983 = vadd.f32 0.0, %v982
  %v984 = vpop.f32.mrb[0].mxu0
  %v985 = vpop.f32.mrb[0].mxu0
  %v986 = vpop.f32.mrb[0].mxu0
  %987 = vdwg.mxu0
  %988 = vmatprep.subr.bf16.mxu0 0
  %989 = vmatpush1.bf16.msra.mxu0 %v918
  %990 = vmatprep.subr.bf16.mxu0 0
  %991 = vmatpush1.bf16.msra.mxu0 %v919
  %992 = vmatprep.subr.bf16.mxu0 0
  %993 = vmatpush1.bf16.msra.mxu0 %v920
  %994 = vmatprep.subr.bf16.mxu0 0
  %995 = vmatpush1.bf16.msra.mxu0 %v921
  %996 = vmatprep.subr.bf16.mxu0 0
  %997 = vmatpush1.bf16.msra.mxu0 %v922
  %998 = vmatprep.subr.bf16.mxu0 0
  %999 = vmatpush1.bf16.msra.mxu0 %v923
  %1000 = vmatprep.subr.bf16.mxu0 0
  %1001 = vmatpush1.bf16.msra.mxu0 %v924
  %1002 = vmatprep.subr.bf16.mxu0 0
  %1003 = vmatpush1.bf16.msra.mxu0 %v925
  %1004 = vmatprep.subr.bf16.mxu0 0
  %1005 = vmatpush1.bf16.msra.mxu0 %v926
  %1006 = vmatprep.subr.bf16.mxu0 0
  %1007 = vmatpush1.bf16.msra.mxu0 %v927
  %1008 = vmatprep.subr.bf16.mxu0 0
  %1009 = vmatpush1.bf16.msra.mxu0 %v928
  %1010 = vmatprep.subr.bf16.mxu0 0
  %1011 = vmatpush1.bf16.msra.mxu0 %v929
  %1012 = vmatprep.subr.bf16.mxu0 0
  %1013 = vmatpush1.bf16.msra.mxu0 %v930
  %1014 = vmatprep.subr.bf16.mxu0 0
  %1015 = vmatpush1.bf16.msra.mxu0 %v931
  %1016 = vmatprep.subr.bf16.mxu0 0
  %1017 = vmatpush1.bf16.msra.mxu0 %v932
  %1018 = vmatprep.subr.bf16.mxu0 0
  %1019 = vmatpush1.bf16.msra.mxu0 %v933
  %1020 = vmatprep.mubr.bf16.mxu0 %v943
  %1021 = vmatmul.mubr.bf16.gmra.mrb[0].mxu0 %v942
  %v1022 = vpop.f32.mrb[0].mxu0
  %v1023 = vadd.f32 %v983, %v1022
  %v1024 = vpop.f32.mrb[0].mxu0
  %v1025 = vpop.f32.mrb[0].mxu0
  %v1026 = vpop.f32.mrb[0].mxu0
  %1027 = vdwg.mxu0
  %v1028 = vld [vmem:[%s1] sm:$0xf]
  %v1030 = vlaneseq
  %v1031 = vshrl.u32 %v1030, 7
  %v1032 = vsub.s32 0, %v1031
  %v1033 = vrot.slane %v207, %v1032
  %v1034 = vlaneseq
  %v1035 = vshrl.u32 %v1034, 7
  %v1036 = vsub.s32 1, %v1035
  %v1037 = vrot.slane %v207, %v1036
  %v1038 = vlaneseq
  %v1039 = vshrl.u32 %v1038, 7
  %v1040 = vsub.s32 2, %v1039
  %v1041 = vrot.slane %v207, %v1040
  %v1042 = vlaneseq
  %v1043 = vshrl.u32 %v1042, 7
  %v1044 = vsub.s32 3, %v1043
  %v1045 = vrot.slane %v207, %v1044
  %v1054 = vunpack.c.l.b16 %v27
  %v1055 = vunpack.c.h.b16 %v27
  %v1056 = vunpack.c.l.b16 %v28
  %v1057 = vunpack.c.h.b16 %v28
  %v1058 = vunpack.c.l.b16 %v29
  %v1059 = vunpack.c.h.b16 %v29
  %v1060 = vunpack.c.l.b16 %v30
  %v1061 = vunpack.c.h.b16 %v30
  %v1062 = vpack.c.b16 %v1058, %v1054
  %v1063 = vpack.c.b16 %v1059, %v1055
  %v1064 = vpack.c.b16 %v1060, %v1056
  %v1065 = vpack.c.b16 %v1061, %v1057
  %vm1070 = vcmask 130048
  %v1072 = vsel %vm1070, %v1028, 0
  %1074 = vmatprep.subr.bf16.mxu0 %v1063
  %1075 = vmatpush1.bf16.msra.mxu0 %v1062
  %1076 = vmatprep.subr.bf16.mxu0 0
  %1077 = vmatpush1.bf16.msra.mxu0 0
  %1078 = vmatprep.subr.bf16.mxu0 0
  %1079 = vmatpush1.bf16.msra.mxu0 0
  %1080 = vmatprep.subr.bf16.mxu0 0
  %1081 = vmatpush1.bf16.msra.mxu0 0
  %1082 = vmatprep.subr.bf16.mxu0 0
  %1083 = vmatpush1.bf16.msra.mxu0 0
  %1084 = vmatprep.subr.bf16.mxu0 0
  %1085 = vmatpush1.bf16.msra.mxu0 0
  %1086 = vmatprep.subr.bf16.mxu0 0
  %1087 = vmatpush1.bf16.msra.mxu0 0
  %1088 = vmatprep.subr.bf16.mxu0 0
  %1089 = vmatpush1.bf16.msra.mxu0 0
  %1090 = vmatprep.subr.bf16.mxu0 0
  %1091 = vmatpush1.bf16.msra.mxu0 0
  %1092 = vmatprep.subr.bf16.mxu0 0
  %1093 = vmatpush1.bf16.msra.mxu0 0
  %1094 = vmatprep.subr.bf16.mxu0 0
  %1095 = vmatpush1.bf16.msra.mxu0 0
  %1096 = vmatprep.subr.bf16.mxu0 0
  %1097 = vmatpush1.bf16.msra.mxu0 0
  %1098 = vmatprep.subr.bf16.mxu0 0
  %1099 = vmatpush1.bf16.msra.mxu0 0
  %1100 = vmatprep.subr.bf16.mxu0 0
  %1101 = vmatpush1.bf16.msra.mxu0 0
  %1102 = vmatprep.subr.bf16.mxu0 0
  %1103 = vmatpush1.bf16.msra.mxu0 0
  %1104 = vmatprep.subr.bf16.mxu0 0
  %1105 = vmatpush1.bf16.msra.mxu0 0
  %1106 = vmatprep.mubr.bf16.mxu0 0
  %1107 = vmatmul.mubr.bf16.gmra.mrb[0].mxu0 %v1072
  %v1108 = vpop.f32.mrb[0].mxu0
  %v1109 = vadd.f32 %v1033, %v1108
  %v1110 = vpop.f32.mrb[0].mxu0
  %v1111 = vadd.f32 %v1037, %v1110
  %v1112 = vpop.f32.mrb[0].mxu0
  %v1113 = vpop.f32.mrb[0].mxu0
  %1114 = vdwg.mxu0
  %1115 = vmatprep.subr.bf16.mxu0 %v1065
  %1116 = vmatpush1.bf16.msra.mxu0 %v1064
  %1117 = vmatprep.subr.bf16.mxu0 0
  %1118 = vmatpush1.bf16.msra.mxu0 0
  %1119 = vmatprep.subr.bf16.mxu0 0
  %1120 = vmatpush1.bf16.msra.mxu0 0
  %1121 = vmatprep.subr.bf16.mxu0 0
  %1122 = vmatpush1.bf16.msra.mxu0 0
  %1123 = vmatprep.subr.bf16.mxu0 0
  %1124 = vmatpush1.bf16.msra.mxu0 0
  %1125 = vmatprep.subr.bf16.mxu0 0
  %1126 = vmatpush1.bf16.msra.mxu0 0
  %1127 = vmatprep.subr.bf16.mxu0 0
  %1128 = vmatpush1.bf16.msra.mxu0 0
  %1129 = vmatprep.subr.bf16.mxu0 0
  %1130 = vmatpush1.bf16.msra.mxu0 0
  %1131 = vmatprep.subr.bf16.mxu0 0
  %1132 = vmatpush1.bf16.msra.mxu0 0
  %1133 = vmatprep.subr.bf16.mxu0 0
  %1134 = vmatpush1.bf16.msra.mxu0 0
  %1135 = vmatprep.subr.bf16.mxu0 0
  %1136 = vmatpush1.bf16.msra.mxu0 0
  %1137 = vmatprep.subr.bf16.mxu0 0
  %1138 = vmatpush1.bf16.msra.mxu0 0
  %1139 = vmatprep.subr.bf16.mxu0 0
  %1140 = vmatpush1.bf16.msra.mxu0 0
  %1141 = vmatprep.subr.bf16.mxu0 0
  %1142 = vmatpush1.bf16.msra.mxu0 0
  %1143 = vmatprep.subr.bf16.mxu0 0
  %1144 = vmatpush1.bf16.msra.mxu0 0
  %1145 = vmatprep.subr.bf16.mxu0 0
  %1146 = vmatpush1.bf16.msra.mxu0 0
  %1147 = vmatprep.mubr.bf16.mxu0 0
  %1148 = vmatmul.mubr.bf16.gmra.mrb[0].mxu0 %v1072
  %v1149 = vpop.f32.mrb[0].mxu0
  %v1150 = vadd.f32 %v1041, %v1149
  %v1151 = vpop.f32.mrb[0].mxu0
  %v1152 = vadd.f32 %v1045, %v1151
  %v1153 = vpop.f32.mrb[0].mxu0
  %v1154 = vpop.f32.mrb[0].mxu0
  %1155 = vdwg.mxu0
  %v1156 = vmin.f32 %v1109, 0.0
  %v1157 = vmin.f32 %v1111, 0.0
  %v1158 = vmin.f32 %v1150, 0.0
  %v1159 = vmin.f32 %v1152, 0.0
  %v1160 = vmul.f32 %v1156, 1.442695
  %v1161 = vpow.pop %v1160
  %v1162 = vmul.f32 %v1157, 1.442695
  %v1163 = vpow.pop %v1162
  %v1164 = vmul.f32 %v1158, 1.442695
  %v1165 = vpow.pop %v1164
  %v1166 = vmul.f32 %v1159, 1.442695
  %v1167 = vpow.pop %v1166
  %v1168 = vsub.f32 %v1161, 1.0
  %v1169 = vsub.f32 %v1163, 1.0
  %v1170 = vsub.f32 %v1165, 1.0
  %v1171 = vsub.f32 %v1167, 1.0
  %v1172 = vmul.f32 %v1168, 1.6732632
  %v1173 = vmul.f32 %v1169, 1.6732632
  %v1174 = vmul.f32 %v1170, 1.6732632
  %v1175 = vmul.f32 %v1171, 1.6732632
  %vm1176 = vcmp.gt.f32.partialorder %v1109, 0.0
  %vm1177 = vcmp.gt.f32.partialorder %v1111, 0.0
  %vm1178 = vcmp.gt.f32.partialorder %v1150, 0.0
  %vm1179 = vcmp.gt.f32.partialorder %v1152, 0.0
  %v1180 = vsel %vm1176, %v1109, %v1172
  %v1181 = vsel %vm1177, %v1111, %v1173
  %v1182 = vsel %vm1178, %v1150, %v1174
  %v1183 = vsel %vm1179, %v1152, %v1175
  %v1184 = vmul.f32 %v1180, 1.050701
  %v1185 = vmul.f32 %v1181, 1.050701
  %v1186 = vmul.f32 %v1182, 1.050701
  %v1187 = vmul.f32 %v1183, 1.050701
  %v1188 = vpack.c.bf16 %v1184, %v1184
  %v1189 = vpack.c.bf16 %v1185, %v1185
  %v1190 = vpack.c.bf16 %v1186, %v1186
  %v1191 = vpack.c.bf16 %v1187, %v1187
  %v1193 = vlaneseq
  %v1194 = vshrl.u32 %v1193, 7
  %v1195 = vsub.s32 0, %v1194
  %v1196 = vrot.slane %v209, %v1195
  %v1197 = vlaneseq
  %v1198 = vshrl.u32 %v1197, 7
  %v1199 = vsub.s32 1, %v1198
  %v1200 = vrot.slane %v209, %v1199
  %v1267 = vunpack.c.l.b16 %v33
  %v1268 = vunpack.c.h.b16 %v33
  %v1269 = vunpack.c.l.b16 %v34
  %v1270 = vunpack.c.h.b16 %v34
  %v1271 = vunpack.c.l.b16 %v35
  %v1272 = vunpack.c.h.b16 %v35
  %v1273 = vunpack.c.l.b16 %v36
  %v1274 = vunpack.c.h.b16 %v36
  %v1275 = vunpack.c.l.b16 %v37
  %v1276 = vunpack.c.h.b16 %v37
  %v1277 = vunpack.c.l.b16 %v38
  %v1278 = vunpack.c.h.b16 %v38
  %v1279 = vunpack.c.l.b16 %v39
  %v1280 = vunpack.c.h.b16 %v39
  %v1281 = vunpack.c.l.b16 %v40
  %v1282 = vunpack.c.h.b16 %v40
  %v1283 = vunpack.c.l.b16 %v41
  %v1284 = vunpack.c.h.b16 %v41
  %v1285 = vunpack.c.l.b16 %v42
  %v1286 = vunpack.c.h.b16 %v42
  %v1287 = vunpack.c.l.b16 %v43
  %v1288 = vunpack.c.h.b16 %v43
  %v1289 = vunpack.c.l.b16 %v44
  %v1290 = vunpack.c.h.b16 %v44
  %v1291 = vunpack.c.l.b16 %v45
  %v1292 = vunpack.c.h.b16 %v45
  %v1293 = vunpack.c.l.b16 %v46
  %v1294 = vunpack.c.h.b16 %v46
  %v1295 = vunpack.c.l.b16 %v47
  %v1296 = vunpack.c.h.b16 %v47
  %v1297 = vunpack.c.l.b16 %v48
  %v1298 = vunpack.c.h.b16 %v48
  %v1299 = vunpack.c.l.b16 %v49
  %v1300 = vunpack.c.h.b16 %v49
  %v1301 = vunpack.c.l.b16 %v50
  %v1302 = vunpack.c.h.b16 %v50
  %v1303 = vunpack.c.l.b16 %v51
  %v1304 = vunpack.c.h.b16 %v51
  %v1305 = vunpack.c.l.b16 %v52
  %v1306 = vunpack.c.h.b16 %v52
  %v1307 = vunpack.c.l.b16 %v53
  %v1308 = vunpack.c.h.b16 %v53
  %v1309 = vunpack.c.l.b16 %v54
  %v1310 = vunpack.c.h.b16 %v54
  %v1311 = vunpack.c.l.b16 %v55
  %v1312 = vunpack.c.h.b16 %v55
  %v1313 = vunpack.c.l.b16 %v56
  %v1314 = vunpack.c.h.b16 %v56
  %v1315 = vunpack.c.l.b16 %v57
  %v1316 = vunpack.c.h.b16 %v57
  %v1317 = vunpack.c.l.b16 %v58
  %v1318 = vunpack.c.h.b16 %v58
  %v1319 = vunpack.c.l.b16 %v59
  %v1320 = vunpack.c.h.b16 %v59
  %v1321 = vunpack.c.l.b16 %v60
  %v1322 = vunpack.c.h.b16 %v60
  %v1323 = vunpack.c.l.b16 %v61
  %v1324 = vunpack.c.h.b16 %v61
  %v1325 = vunpack.c.l.b16 %v62
  %v1326 = vunpack.c.h.b16 %v62
  %v1327 = vunpack.c.l.b16 %v63
  %v1328 = vunpack.c.h.b16 %v63
  %v1329 = vunpack.c.l.b16 %v64
  %v1330 = vunpack.c.h.b16 %v64
  %v1331 = vunpack.c.l.b16 %v65
  %v1332 = vunpack.c.h.b16 %v65
  %v1333 = vunpack.c.l.b16 %v66
  %v1334 = vunpack.c.h.b16 %v66
  %v1335 = vunpack.c.l.b16 %v67
  %v1336 = vunpack.c.h.b16 %v67
  %v1337 = vunpack.c.l.b16 %v68
  %v1338 = vunpack.c.h.b16 %v68
  %v1339 = vunpack.c.l.b16 %v69
  %v1340 = vunpack.c.h.b16 %v69
  %v1341 = vunpack.c.l.b16 %v70
  %v1342 = vunpack.c.h.b16 %v70
  %v1343 = vunpack.c.l.b16 %v71
  %v1344 = vunpack.c.h.b16 %v71
  %v1345 = vunpack.c.l.b16 %v72
  %v1346 = vunpack.c.h.b16 %v72
  %v1347 = vunpack.c.l.b16 %v73
  %v1348 = vunpack.c.h.b16 %v73
  %v1349 = vunpack.c.l.b16 %v74
  %v1350 = vunpack.c.h.b16 %v74
  %v1351 = vunpack.c.l.b16 %v75
  %v1352 = vunpack.c.h.b16 %v75
  %v1353 = vunpack.c.l.b16 %v76
  %v1354 = vunpack.c.h.b16 %v76
  %v1355 = vunpack.c.l.b16 %v77
  %v1356 = vunpack.c.h.b16 %v77
  %v1357 = vunpack.c.l.b16 %v78
  %v1358 = vunpack.c.h.b16 %v78
  %v1359 = vunpack.c.l.b16 %v79
  %v1360 = vunpack.c.h.b16 %v79
  %v1361 = vunpack.c.l.b16 %v80
  %v1362 = vunpack.c.h.b16 %v80
  %v1363 = vunpack.c.l.b16 %v81
  %v1364 = vunpack.c.h.b16 %v81
  %v1365 = vunpack.c.l.b16 %v82
  %v1366 = vunpack.c.h.b16 %v82
  %v1367 = vunpack.c.l.b16 %v83
  %v1368 = vunpack.c.h.b16 %v83
  %v1369 = vunpack.c.l.b16 %v84
  %v1370 = vunpack.c.h.b16 %v84
  %v1371 = vunpack.c.l.b16 %v85
  %v1372 = vunpack.c.h.b16 %v85
  %v1373 = vunpack.c.l.b16 %v86
  %v1374 = vunpack.c.h.b16 %v86
  %v1375 = vunpack.c.l.b16 %v87
  %v1376 = vunpack.c.h.b16 %v87
  %v1377 = vunpack.c.l.b16 %v88
  %v1378 = vunpack.c.h.b16 %v88
  %v1379 = vunpack.c.l.b16 %v89
  %v1380 = vunpack.c.h.b16 %v89
  %v1381 = vunpack.c.l.b16 %v90
  %v1382 = vunpack.c.h.b16 %v90
  %v1383 = vunpack.c.l.b16 %v91
  %v1384 = vunpack.c.h.b16 %v91
  %v1385 = vunpack.c.l.b16 %v92
  %v1386 = vunpack.c.h.b16 %v92
  %v1387 = vunpack.c.l.b16 %v93
  %v1388 = vunpack.c.h.b16 %v93
  %v1389 = vunpack.c.l.b16 %v94
  %v1390 = vunpack.c.h.b16 %v94
  %v1391 = vunpack.c.l.b16 %v95
  %v1392 = vunpack.c.h.b16 %v95
  %v1393 = vunpack.c.l.b16 %v96
  %v1394 = vunpack.c.h.b16 %v96
  %v1395 = vpack.c.b16 %v1269, %v1267
  %v1396 = vpack.c.b16 %v1270, %v1268
  %v1397 = vpack.c.b16 %v1273, %v1271
  %v1398 = vpack.c.b16 %v1274, %v1272
  %v1399 = vpack.c.b16 %v1277, %v1275
  %v1400 = vpack.c.b16 %v1278, %v1276
  %v1401 = vpack.c.b16 %v1281, %v1279
  %v1402 = vpack.c.b16 %v1282, %v1280
  %v1403 = vpack.c.b16 %v1285, %v1283
  %v1404 = vpack.c.b16 %v1286, %v1284
  %v1405 = vpack.c.b16 %v1289, %v1287
  %v1406 = vpack.c.b16 %v1290, %v1288
  %v1407 = vpack.c.b16 %v1293, %v1291
  %v1408 = vpack.c.b16 %v1294, %v1292
  %v1409 = vpack.c.b16 %v1297, %v1295
  %v1410 = vpack.c.b16 %v1298, %v1296
  %v1411 = vpack.c.b16 %v1301, %v1299
  %v1412 = vpack.c.b16 %v1302, %v1300
  %v1413 = vpack.c.b16 %v1305, %v1303
  %v1414 = vpack.c.b16 %v1306, %v1304
  %v1415 = vpack.c.b16 %v1309, %v1307
  %v1416 = vpack.c.b16 %v1310, %v1308
  %v1417 = vpack.c.b16 %v1313, %v1311
  %v1418 = vpack.c.b16 %v1314, %v1312
  %v1419 = vpack.c.b16 %v1317, %v1315
  %v1420 = vpack.c.b16 %v1318, %v1316
  %v1421 = vpack.c.b16 %v1321, %v1319
  %v1422 = vpack.c.b16 %v1322, %v1320
  %v1423 = vpack.c.b16 %v1325, %v1323
  %v1424 = vpack.c.b16 %v1326, %v1324
  %v1425 = vpack.c.b16 %v1329, %v1327
  %v1426 = vpack.c.b16 %v1330, %v1328
  %v1427 = vpack.c.b16 %v1333, %v1331
  %v1428 = vpack.c.b16 %v1334, %v1332
  %v1429 = vpack.c.b16 %v1337, %v1335
  %v1430 = vpack.c.b16 %v1338, %v1336
  %v1431 = vpack.c.b16 %v1341, %v1339
  %v1432 = vpack.c.b16 %v1342, %v1340
  %v1433 = vpack.c.b16 %v1345, %v1343
  %v1434 = vpack.c.b16 %v1346, %v1344
  %v1435 = vpack.c.b16 %v1349, %v1347
  %v1436 = vpack.c.b16 %v1350, %v1348
  %v1437 = vpack.c.b16 %v1353, %v1351
  %v1438 = vpack.c.b16 %v1354, %v1352
  %v1439 = vpack.c.b16 %v1357, %v1355
  %v1440 = vpack.c.b16 %v1358, %v1356
  %v1441 = vpack.c.b16 %v1361, %v1359
  %v1442 = vpack.c.b16 %v1362, %v1360
  %v1443 = vpack.c.b16 %v1365, %v1363
  %v1444 = vpack.c.b16 %v1366, %v1364
  %v1445 = vpack.c.b16 %v1369, %v1367
  %v1446 = vpack.c.b16 %v1370, %v1368
  %v1447 = vpack.c.b16 %v1373, %v1371
  %v1448 = vpack.c.b16 %v1374, %v1372
  %v1449 = vpack.c.b16 %v1377, %v1375
  %v1450 = vpack.c.b16 %v1378, %v1376
  %v1451 = vpack.c.b16 %v1381, %v1379
  %v1452 = vpack.c.b16 %v1382, %v1380
  %v1453 = vpack.c.b16 %v1385, %v1383
  %v1454 = vpack.c.b16 %v1386, %v1384
  %v1455 = vpack.c.b16 %v1389, %v1387
  %v1456 = vpack.c.b16 %v1390, %v1388
  %v1457 = vpack.c.b16 %v1393, %v1391
  %v1458 = vpack.c.b16 %v1394, %v1392
  %1523 = vmatprep.subr.bf16.mxu0 %v1396
  %1524 = vmatpush1.bf16.msra.mxu0 %v1395
  %1525 = vmatprep.subr.bf16.mxu0 %v1398
  %1526 = vmatpush1.bf16.msra.mxu0 %v1397
  %1527 = vmatprep.subr.bf16.mxu0 %v1400
  %1528 = vmatpush1.bf16.msra.mxu0 %v1399
  %1529 = vmatprep.subr.bf16.mxu0 %v1402
  %1530 = vmatpush1.bf16.msra.mxu0 %v1401
  %1531 = vmatprep.subr.bf16.mxu0 %v1404
  %1532 = vmatpush1.bf16.msra.mxu0 %v1403
  %1533 = vmatprep.subr.bf16.mxu0 %v1406
  %1534 = vmatpush1.bf16.msra.mxu0 %v1405
  %1535 = vmatprep.subr.bf16.mxu0 %v1408
  %1536 = vmatpush1.bf16.msra.mxu0 %v1407
  %1537 = vmatprep.subr.bf16.mxu0 %v1410
  %1538 = vmatpush1.bf16.msra.mxu0 %v1409
  %1539 = vmatprep.subr.bf16.mxu0 %v1412
  %1540 = vmatpush1.bf16.msra.mxu0 %v1411
  %1541 = vmatprep.subr.bf16.mxu0 %v1414
  %1542 = vmatpush1.bf16.msra.mxu0 %v1413
  %1543 = vmatprep.subr.bf16.mxu0 %v1416
  %1544 = vmatpush1.bf16.msra.mxu0 %v1415
  %1545 = vmatprep.subr.bf16.mxu0 %v1418
  %1546 = vmatpush1.bf16.msra.mxu0 %v1417
  %1547 = vmatprep.subr.bf16.mxu0 %v1420
  %1548 = vmatpush1.bf16.msra.mxu0 %v1419
  %1549 = vmatprep.subr.bf16.mxu0 %v1422
  %1550 = vmatpush1.bf16.msra.mxu0 %v1421
  %1551 = vmatprep.subr.bf16.mxu0 %v1424
  %1552 = vmatpush1.bf16.msra.mxu0 %v1423
  %1553 = vmatprep.subr.bf16.mxu0 %v1426
  %1554 = vmatpush1.bf16.msra.mxu0 %v1425
  %1555 = vmatprep.mubr.bf16.mxu0 %v1189
  %1556 = vmatmul.mubr.bf16.gmra.mrb[0].mxu0 %v1188
  %v1557 = vpop.f32.mrb[0].mxu0
  %v1558 = vadd.f32 %v1196, %v1557
  %v1559 = vpop.f32.mrb[0].mxu0
  %v1560 = vadd.f32 %v1200, %v1559
  %v1561 = vpop.f32.mrb[0].mxu0
  %v1562 = vpop.f32.mrb[0].mxu0
  %1563 = vdwg.mxu0
  %1564 = vmatprep.subr.bf16.mxu0 %v1428
  %1565 = vmatpush1.bf16.msra.mxu0 %v1427
  %1566 = vmatprep.subr.bf16.mxu0 %v1430
  %1567 = vmatpush1.bf16.msra.mxu0 %v1429
  %1568 = vmatprep.subr.bf16.mxu0 %v1432
  %1569 = vmatpush1.bf16.msra.mxu0 %v1431
  %1570 = vmatprep.subr.bf16.mxu0 %v1434
  %1571 = vmatpush1.bf16.msra.mxu0 %v1433
  %1572 = vmatprep.subr.bf16.mxu0 %v1436
  %1573 = vmatpush1.bf16.msra.mxu0 %v1435
  %1574 = vmatprep.subr.bf16.mxu0 %v1438
  %1575 = vmatpush1.bf16.msra.mxu0 %v1437
  %1576 = vmatprep.subr.bf16.mxu0 %v1440
  %1577 = vmatpush1.bf16.msra.mxu0 %v1439
  %1578 = vmatprep.subr.bf16.mxu0 %v1442
  %1579 = vmatpush1.bf16.msra.mxu0 %v1441
  %1580 = vmatprep.subr.bf16.mxu0 %v1444
  %1581 = vmatpush1.bf16.msra.mxu0 %v1443
  %1582 = vmatprep.subr.bf16.mxu0 %v1446
  %1583 = vmatpush1.bf16.msra.mxu0 %v1445
  %1584 = vmatprep.subr.bf16.mxu0 %v1448
  %1585 = vmatpush1.bf16.msra.mxu0 %v1447
  %1586 = vmatprep.subr.bf16.mxu0 %v1450
  %1587 = vmatpush1.bf16.msra.mxu0 %v1449
  %1588 = vmatprep.subr.bf16.mxu0 %v1452
  %1589 = vmatpush1.bf16.msra.mxu0 %v1451
  %1590 = vmatprep.subr.bf16.mxu0 %v1454
  %1591 = vmatpush1.bf16.msra.mxu0 %v1453
  %1592 = vmatprep.subr.bf16.mxu0 %v1456
  %1593 = vmatpush1.bf16.msra.mxu0 %v1455
  %1594 = vmatprep.subr.bf16.mxu0 %v1458
  %1595 = vmatpush1.bf16.msra.mxu0 %v1457
  %1596 = vmatprep.mubr.bf16.mxu0 %v1191
  %1597 = vmatmul.mubr.bf16.gmra.mrb[0].mxu0 %v1190
  %v1598 = vpop.f32.mrb[0].mxu0
  %v1599 = vadd.f32 %v1558, %v1598
  %v1600 = vpop.f32.mrb[0].mxu0
  %v1601 = vadd.f32 %v1560, %v1600
  %v1602 = vpop.f32.mrb[0].mxu0
  %v1603 = vpop.f32.mrb[0].mxu0
  %1604 = vdwg.mxu0
  %v1605 = vmin.f32 %v1599, 0.0
  %v1606 = vmin.f32 %v1601, 0.0
  %v1607 = vmul.f32 %v1605, 1.442695
  %v1608 = vpow.pop %v1607
  %v1609 = vmul.f32 %v1606, 1.442695
  %v1610 = vpow.pop %v1609
  %v1611 = vsub.f32 %v1608, 1.0
  %v1612 = vsub.f32 %v1610, 1.0
  %v1613 = vmul.f32 %v1611, 1.6732632
  %v1614 = vmul.f32 %v1612, 1.6732632
  %vm1615 = vcmp.gt.f32.partialorder %v1599, 0.0
  %vm1616 = vcmp.gt.f32.partialorder %v1601, 0.0
  %v1617 = vsel %vm1615, %v1599, %v1613
  %v1618 = vsel %vm1616, %v1601, %v1614
  %v1619 = vmul.f32 %v1617, 1.050701
  %v1620 = vmul.f32 %v1618, 1.050701
  %v1621 = vpack.c.bf16 %v1619, %v1619
  %v1622 = vpack.c.bf16 %v1620, %v1620
  %v1655 = vunpack.c.l.b16 %v113
  %v1656 = vunpack.c.l.b16 %v114
  %v1657 = vunpack.c.l.b16 %v115
  %v1658 = vunpack.c.l.b16 %v116
  %v1659 = vunpack.c.l.b16 %v117
  %v1660 = vunpack.c.l.b16 %v118
  %v1661 = vunpack.c.l.b16 %v119
  %v1662 = vunpack.c.l.b16 %v120
  %v1663 = vunpack.c.l.b16 %v121
  %v1664 = vunpack.c.l.b16 %v122
  %v1665 = vunpack.c.l.b16 %v123
  %v1666 = vunpack.c.l.b16 %v124
  %v1667 = vunpack.c.l.b16 %v125
  %v1668 = vunpack.c.l.b16 %v126
  %v1669 = vunpack.c.l.b16 %v127
  %v1670 = vunpack.c.l.b16 %v128
  %v1671 = vunpack.c.l.b16 %v129
  %v1672 = vunpack.c.l.b16 %v130
  %v1673 = vunpack.c.l.b16 %v131
  %v1674 = vunpack.c.l.b16 %v132
  %v1675 = vunpack.c.l.b16 %v133
  %v1676 = vunpack.c.l.b16 %v134
  %v1677 = vunpack.c.l.b16 %v135
  %v1678 = vunpack.c.l.b16 %v136
  %v1679 = vunpack.c.l.b16 %v137
  %v1680 = vunpack.c.l.b16 %v138
  %v1681 = vunpack.c.l.b16 %v139
  %v1682 = vunpack.c.l.b16 %v140
  %v1683 = vunpack.c.l.b16 %v141
  %v1684 = vunpack.c.l.b16 %v142
  %v1685 = vunpack.c.l.b16 %v143
  %v1686 = vunpack.c.l.b16 %v144
  %v1687 = vpack.c.b16 %v1656, %v1655
  %v1688 = vpack.c.b16 %v1658, %v1657
  %v1689 = vpack.c.b16 %v1660, %v1659
  %v1690 = vpack.c.b16 %v1662, %v1661
  %v1691 = vpack.c.b16 %v1664, %v1663
  %v1692 = vpack.c.b16 %v1666, %v1665
  %v1693 = vpack.c.b16 %v1668, %v1667
  %v1694 = vpack.c.b16 %v1670, %v1669
  %v1695 = vpack.c.b16 %v1672, %v1671
  %v1696 = vpack.c.b16 %v1674, %v1673
  %v1697 = vpack.c.b16 %v1676, %v1675
  %v1698 = vpack.c.b16 %v1678, %v1677
  %v1699 = vpack.c.b16 %v1680, %v1679
  %v1700 = vpack.c.b16 %v1682, %v1681
  %v1701 = vpack.c.b16 %v1684, %v1683
  %v1702 = vpack.c.b16 %v1686, %v1685
  %1719 = vmatprep.subr.bf16.mxu0 0
  %1720 = vmatpush1.bf16.msra.mxu0 %v1687
  %1721 = vmatprep.subr.bf16.mxu0 0
  %1722 = vmatpush1.bf16.msra.mxu0 %v1688
  %1723 = vmatprep.subr.bf16.mxu0 0
  %1724 = vmatpush1.bf16.msra.mxu0 %v1689
  %1725 = vmatprep.subr.bf16.mxu0 0
  %1726 = vmatpush1.bf16.msra.mxu0 %v1690
  %1727 = vmatprep.subr.bf16.mxu0 0
  %1728 = vmatpush1.bf16.msra.mxu0 %v1691
  %1729 = vmatprep.subr.bf16.mxu0 0
  %1730 = vmatpush1.bf16.msra.mxu0 %v1692
  %1731 = vmatprep.subr.bf16.mxu0 0
  %1732 = vmatpush1.bf16.msra.mxu0 %v1693
  %1733 = vmatprep.subr.bf16.mxu0 0
  %1734 = vmatpush1.bf16.msra.mxu0 %v1694
  %1735 = vmatprep.subr.bf16.mxu0 0
  %1736 = vmatpush1.bf16.msra.mxu0 %v1695
  %1737 = vmatprep.subr.bf16.mxu0 0
  %1738 = vmatpush1.bf16.msra.mxu0 %v1696
  %1739 = vmatprep.subr.bf16.mxu0 0
  %1740 = vmatpush1.bf16.msra.mxu0 %v1697
  %1741 = vmatprep.subr.bf16.mxu0 0
  %1742 = vmatpush1.bf16.msra.mxu0 %v1698
  %1743 = vmatprep.subr.bf16.mxu0 0
  %1744 = vmatpush1.bf16.msra.mxu0 %v1699
  %1745 = vmatprep.subr.bf16.mxu0 0
  %1746 = vmatpush1.bf16.msra.mxu0 %v1700
  %1747 = vmatprep.subr.bf16.mxu0 0
  %1748 = vmatpush1.bf16.msra.mxu0 %v1701
  %1749 = vmatprep.subr.bf16.mxu0 0
  %1750 = vmatpush1.bf16.msra.mxu0 %v1702
  %1751 = vmatprep.mubr.bf16.mxu0 %v1622
  %1752 = vmatmul.mubr.bf16.gmra.mrb[0].mxu0 %v1621
  %v1753 = vpop.f32.mrb[0].mxu0
  %v1754 = vadd.f32 %v210, %v1753
  %v1755 = vpop.f32.mrb[0].mxu0
  %v1756 = vpop.f32.mrb[0].mxu0
  %v1757 = vpop.f32.mrb[0].mxu0
  %1758 = vdwg.mxu0
  %v1759 = vmin.f32 %v1754, 0.0
  %v1760 = vmul.f32 %v1759, 1.442695
  %v1761 = vpow.pop %v1760
  %v1762 = vsub.f32 %v1761, 1.0
  %v1763 = vmul.f32 %v1762, 1.6732632
  %vm1764 = vcmp.gt.f32.partialorder %v1754, 0.0
  %v1765 = vsel %vm1764, %v1754, %v1763
  %v1766 = vmul.f32 %v1765, 1.050701
  %v1767 = vpack.c.bf16 %v1766, %v1766
  %v1784 = vunpack.c.l.b16 %v177
  %v1785 = vunpack.c.l.b16 %v178
  %v1786 = vunpack.c.l.b16 %v179
  %v1787 = vunpack.c.l.b16 %v180
  %v1788 = vunpack.c.l.b16 %v181
  %v1789 = vunpack.c.l.b16 %v182
  %v1790 = vunpack.c.l.b16 %v183
  %v1791 = vunpack.c.l.b16 %v184
  %v1792 = vunpack.c.l.b16 %v185
  %v1793 = vunpack.c.l.b16 %v186
  %v1794 = vunpack.c.l.b16 %v187
  %v1795 = vunpack.c.l.b16 %v188
  %v1796 = vunpack.c.l.b16 %v189
  %v1797 = vunpack.c.l.b16 %v190
  %v1798 = vunpack.c.l.b16 %v191
  %v1799 = vunpack.c.l.b16 %v192
  %v1800 = vpack.c.b16 %v1785, %v1784
  %v1801 = vpack.c.b16 %v1787, %v1786
  %v1802 = vpack.c.b16 %v1789, %v1788
  %v1803 = vpack.c.b16 %v1791, %v1790
  %v1804 = vpack.c.b16 %v1793, %v1792
  %v1805 = vpack.c.b16 %v1795, %v1794
  %v1806 = vpack.c.b16 %v1797, %v1796
  %v1807 = vpack.c.b16 %v1799, %v1798
  %1816 = vmatprep.subr.bf16.mxu0 0
  %1817 = vmatpush1.bf16.msra.mxu0 %v1800
  %1818 = vmatprep.subr.bf16.mxu0 0
  %1819 = vmatpush1.bf16.msra.mxu0 %v1801
  %1820 = vmatprep.subr.bf16.mxu0 0
  %1821 = vmatpush1.bf16.msra.mxu0 %v1802
  %1822 = vmatprep.subr.bf16.mxu0 0
  %1823 = vmatpush1.bf16.msra.mxu0 %v1803
  %1824 = vmatprep.subr.bf16.mxu0 0
  %1825 = vmatpush1.bf16.msra.mxu0 %v1804
  %1826 = vmatprep.subr.bf16.mxu0 0
  %1827 = vmatpush1.bf16.msra.mxu0 %v1805
  %1828 = vmatprep.subr.bf16.mxu0 0
  %1829 = vmatpush1.bf16.msra.mxu0 %v1806
  %1830 = vmatprep.subr.bf16.mxu0 0
  %1831 = vmatpush1.bf16.msra.mxu0 %v1807
  %1832 = vmatprep.subr.bf16.mxu0 0
  %1833 = vmatpush1.bf16.msra.mxu0 0
  %1834 = vmatprep.subr.bf16.mxu0 0
  %1835 = vmatpush1.bf16.msra.mxu0 0
  %1836 = vmatprep.subr.bf16.mxu0 0
  %1837 = vmatpush1.bf16.msra.mxu0 0
  %1838 = vmatprep.subr.bf16.mxu0 0
  %1839 = vmatpush1.bf16.msra.mxu0 0
  %1840 = vmatprep.subr.bf16.mxu0 0
  %1841 = vmatpush1.bf16.msra.mxu0 0
  %1842 = vmatprep.subr.bf16.mxu0 0
  %1843 = vmatpush1.bf16.msra.mxu0 0
  %1844 = vmatprep.subr.bf16.mxu0 0
  %1845 = vmatpush1.bf16.msra.mxu0 0
  %1846 = vmatprep.subr.bf16.mxu0 0
  %1847 = vmatpush1.bf16.msra.mxu0 0
  %1848 = vmatprep.mubr.bf16.mxu0 0
  %1849 = vmatmul.mubr.bf16.gmra.mrb[0].mxu0 %v1767
  %v1850 = vpop.f32.mrb[0].mxu0
  %v1851 = vadd.f32 %v211, %v1850
  %v1852 = vpop.f32.mrb[0].mxu0
  %v1853 = vpop.f32.mrb[0].mxu0
  %v1854 = vpop.f32.mrb[0].mxu0
  %1855 = vdwg.mxu0
  %v1856 = vmin.f32 %v1851, 0.0
  %v1857 = vmul.f32 %v1856, 1.442695
  %v1858 = vpow.pop %v1857
  %v1859 = vsub.f32 %v1858, 1.0
  %v1860 = vmul.f32 %v1859, 1.6732632
  %vm1861 = vcmp.gt.f32.partialorder %v1851, 0.0
  %v1862 = vsel %vm1861, %v1851, %v1860
  %v1863 = vmul.f32 %v1862, 1.050701
  %v1864 = vpack.c.bf16 %v1863, %v1863
  %v1873 = vunpack.c.l.b16 %v193
  %v1874 = vunpack.c.l.b16 %v194
  %v1875 = vunpack.c.l.b16 %v195
  %v1876 = vunpack.c.l.b16 %v196
  %v1877 = vunpack.c.l.b16 %v197
  %v1878 = vunpack.c.l.b16 %v198
  %v1879 = vunpack.c.l.b16 %v199
  %v1880 = vunpack.c.l.b16 %v200
  %v1881 = vpack.c.b16 %v1874, %v1873
  %v1882 = vpack.c.b16 %v1876, %v1875
  %v1883 = vpack.c.b16 %v1878, %v1877
  %v1884 = vpack.c.b16 %v1880, %v1879
  %vm1889 = vcmask 523264
  %v1891 = vsel %vm1889, %v1864, 0
  %1893 = vmatprep.subr.bf16.mxu0 0
  %1894 = vmatpush1.bf16.msra.mxu0 %v1881
  %1895 = vmatprep.subr.bf16.mxu0 0
  %1896 = vmatpush1.bf16.msra.mxu0 %v1882
  %1897 = vmatprep.subr.bf16.mxu0 0
  %1898 = vmatpush1.bf16.msra.mxu0 %v1883
  %1899 = vmatprep.subr.bf16.mxu0 0
  %1900 = vmatpush1.bf16.msra.mxu0 %v1884
  %1901 = vmatprep.subr.bf16.mxu0 0
  %1902 = vmatpush1.bf16.msra.mxu0 0
  %1903 = vmatprep.subr.bf16.mxu0 0
  %1904 = vmatpush1.bf16.msra.mxu0 0
  %1905 = vmatprep.subr.bf16.mxu0 0
  %1906 = vmatpush1.bf16.msra.mxu0 0
  %1907 = vmatprep.subr.bf16.mxu0 0
  %1908 = vmatpush1.bf16.msra.mxu0 0
  %1909 = vmatprep.subr.bf16.mxu0 0
  %1910 = vmatpush1.bf16.msra.mxu0 0
  %1911 = vmatprep.subr.bf16.mxu0 0
  %1912 = vmatpush1.bf16.msra.mxu0 0
  %1913 = vmatprep.subr.bf16.mxu0 0
  %1914 = vmatpush1.bf16.msra.mxu0 0
  %1915 = vmatprep.subr.bf16.mxu0 0
  %1916 = vmatpush1.bf16.msra.mxu0 0
  %1917 = vmatprep.subr.bf16.mxu0 0
  %1918 = vmatpush1.bf16.msra.mxu0 0
  %1919 = vmatprep.subr.bf16.mxu0 0
  %1920 = vmatpush1.bf16.msra.mxu0 0
  %1921 = vmatprep.subr.bf16.mxu0 0
  %1922 = vmatpush1.bf16.msra.mxu0 0
  %1923 = vmatprep.subr.bf16.mxu0 0
  %1924 = vmatpush1.bf16.msra.mxu0 0
  %1925 = vmatprep.mubr.bf16.mxu0 0
  %1926 = vmatmul.mubr.bf16.gmra.mrb[0].mxu0 %v1891
  %v1927 = vpop.f32.mrb[0].mxu0
  %v1928 = vadd.f32 %v212, %v1927
  %v1929 = vpop.f32.mrb[0].mxu0
  %v1930 = vpop.f32.mrb[0].mxu0
  %v1931 = vpop.f32.mrb[0].mxu0
  %1932 = vdwg.mxu0
  %v1933 = vmin.f32 %v1928, 0.0
  %v1934 = vmul.f32 %v1933, 1.442695
  %v1935 = vpow.pop %v1934
  %v1936 = vsub.f32 %v1935, 1.0
  %v1937 = vmul.f32 %v1936, 1.6732632
  %vm1938 = vcmp.gt.f32.partialorder %v1928, 0.0
  %v1939 = vsel %vm1938, %v1928, %v1937
  %v1940 = vmul.f32 %v1939, 1.050701
  %v1941 = vpack.c.bf16 %v1023, %v1023
  %v1942 = vpack.c.bf16 %v1940, %v1940
  %v1951 = vunpack.c.l.b16 %v105
  %v1952 = vunpack.c.h.b16 %v105
  %v1953 = vunpack.c.l.b16 %v106
  %v1954 = vunpack.c.h.b16 %v106
  %v1955 = vunpack.c.l.b16 %v107
  %v1956 = vunpack.c.h.b16 %v107
  %v1957 = vunpack.c.l.b16 %v108
  %v1958 = vunpack.c.h.b16 %v108
  %v1959 = vunpack.c.l.b16 %v109
  %v1960 = vunpack.c.h.b16 %v109
  %v1961 = vunpack.c.l.b16 %v110
  %v1962 = vunpack.c.h.b16 %v110
  %v1963 = vunpack.c.l.b16 %v111
  %v1964 = vunpack.c.h.b16 %v111
  %v1965 = vunpack.c.l.b16 %v112
  %v1966 = vunpack.c.h.b16 %v112
  %v1967 = vpack.c.b16 %v1953, %v1951
  %v1968 = vpack.c.b16 %v1954, %v1952
  %v1969 = vpack.c.b16 %v1957, %v1955
  %v1970 = vpack.c.b16 %v1958, %v1956
  %v1971 = vpack.c.b16 %v1961, %v1959
  %v1972 = vpack.c.b16 %v1962, %v1960
  %v1973 = vpack.c.b16 %v1965, %v1963
  %v1974 = vpack.c.b16 %v1966, %v1964
  %v1984 = vsel %vm1889, %v1942, 0
  %1986 = vmatprep.subr.bf16.mxu0 %v1968
  %1987 = vmatpush1.bf16.msra.mxu0 %v1967
  %1988 = vmatprep.subr.bf16.mxu0 %v1970
  %1989 = vmatpush1.bf16.msra.mxu0 %v1969
  %1990 = vmatprep.subr.bf16.mxu0 %v1972
  %1991 = vmatpush1.bf16.msra.mxu0 %v1971
  %1992 = vmatprep.subr.bf16.mxu0 %v1974
  %1993 = vmatpush1.bf16.msra.mxu0 %v1973
  %1994 = vmatprep.subr.bf16.mxu0 0
  %1995 = vmatpush1.bf16.msra.mxu0 0
  %1996 = vmatprep.subr.bf16.mxu0 0
  %1997 = vmatpush1.bf16.msra.mxu0 0
  %1998 = vmatprep.subr.bf16.mxu0 0
  %1999 = vmatpush1.bf16.msra.mxu0 0
  %2000 = vmatprep.subr.bf16.mxu0 0
  %2001 = vmatpush1.bf16.msra.mxu0 0
  %2002 = vmatprep.subr.bf16.mxu0 0
  %2003 = vmatpush1.bf16.msra.mxu0 0
  %2004 = vmatprep.subr.bf16.mxu0 0
  %2005 = vmatpush1.bf16.msra.mxu0 0
  %2006 = vmatprep.subr.bf16.mxu0 0
  %2007 = vmatpush1.bf16.msra.mxu0 0
  %2008 = vmatprep.subr.bf16.mxu0 0
  %2009 = vmatpush1.bf16.msra.mxu0 0
  %2010 = vmatprep.subr.bf16.mxu0 0
  %2011 = vmatpush1.bf16.msra.mxu0 0
  %2012 = vmatprep.subr.bf16.mxu0 0
  %2013 = vmatpush1.bf16.msra.mxu0 0
  %2014 = vmatprep.subr.bf16.mxu0 0
  %2015 = vmatpush1.bf16.msra.mxu0 0
  %2016 = vmatprep.subr.bf16.mxu0 0
  %2017 = vmatpush1.bf16.msra.mxu0 0
  %2018 = vmatprep.mubr.bf16.mxu0 0
  %2019 = vmatmul.mubr.bf16.gmra.mrb[0].mxu0 %v1984
  %v2020 = vpop.f32.mrb[0].mxu0
  %v2021 = vadd.f32 0.0, %v2020
  %v2022 = vpop.f32.mrb[0].mxu0
  %v2023 = vadd.f32 0.0, %v2022
  %v2024 = vpop.f32.mrb[0].mxu0
  %v2025 = vpop.f32.mrb[0].mxu0
  %2026 = vdwg.mxu0
  %v2035 = vunpack.c.l.b16 %v97
  %v2036 = vunpack.c.h.b16 %v97
  %v2037 = vunpack.c.l.b16 %v98
  %v2038 = vunpack.c.h.b16 %v98
  %v2039 = vunpack.c.l.b16 %v99
  %v2040 = vunpack.c.h.b16 %v99
  %v2041 = vunpack.c.l.b16 %v100
  %v2042 = vunpack.c.h.b16 %v100
  %v2043 = vunpack.c.l.b16 %v101
  %v2044 = vunpack.c.h.b16 %v101
  %v2045 = vunpack.c.l.b16 %v102
  %v2046 = vunpack.c.h.b16 %v102
  %v2047 = vunpack.c.l.b16 %v103
  %v2048 = vunpack.c.h.b16 %v103
  %v2049 = vunpack.c.l.b16 %v104
  %v2050 = vunpack.c.h.b16 %v104
  %v2051 = vpack.c.b16 %v2037, %v2035
  %v2052 = vpack.c.b16 %v2038, %v2036
  %v2053 = vpack.c.b16 %v2041, %v2039
  %v2054 = vpack.c.b16 %v2042, %v2040
  %v2055 = vpack.c.b16 %v2045, %v2043
  %v2056 = vpack.c.b16 %v2046, %v2044
  %v2057 = vpack.c.b16 %v2049, %v2047
  %v2058 = vpack.c.b16 %v2050, %v2048
  %v2068 = vsel %vm1889, %v1941, 0
  %2070 = vmatprep.subr.bf16.mxu0 %v2052
  %2071 = vmatpush1.bf16.msra.mxu0 %v2051
  %2072 = vmatprep.subr.bf16.mxu0 %v2054
  %2073 = vmatpush1.bf16.msra.mxu0 %v2053
  %2074 = vmatprep.subr.bf16.mxu0 %v2056
  %2075 = vmatpush1.bf16.msra.mxu0 %v2055
  %2076 = vmatprep.subr.bf16.mxu0 %v2058
  %2077 = vmatpush1.bf16.msra.mxu0 %v2057
  %2078 = vmatprep.subr.bf16.mxu0 0
  %2079 = vmatpush1.bf16.msra.mxu0 0
  %2080 = vmatprep.subr.bf16.mxu0 0
  %2081 = vmatpush1.bf16.msra.mxu0 0
  %2082 = vmatprep.subr.bf16.mxu0 0
  %2083 = vmatpush1.bf16.msra.mxu0 0
  %2084 = vmatprep.subr.bf16.mxu0 0
  %2085 = vmatpush1.bf16.msra.mxu0 0
  %2086 = vmatprep.subr.bf16.mxu0 0
  %2087 = vmatpush1.bf16.msra.mxu0 0
  %2088 = vmatprep.subr.bf16.mxu0 0
  %2089 = vmatpush1.bf16.msra.mxu0 0
  %2090 = vmatprep.subr.bf16.mxu0 0
  %2091 = vmatpush1.bf16.msra.mxu0 0
  %2092 = vmatprep.subr.bf16.mxu0 0
  %2093 = vmatpush1.bf16.msra.mxu0 0
  %2094 = vmatprep.subr.bf16.mxu0 0
  %2095 = vmatpush1.bf16.msra.mxu0 0
  %2096 = vmatprep.subr.bf16.mxu0 0
  %2097 = vmatpush1.bf16.msra.mxu0 0
  %2098 = vmatprep.subr.bf16.mxu0 0
  %2099 = vmatpush1.bf16.msra.mxu0 0
  %2100 = vmatprep.subr.bf16.mxu0 0
  %2101 = vmatpush1.bf16.msra.mxu0 0
  %2102 = vmatprep.mubr.bf16.mxu0 0
  %2103 = vmatmul.mubr.bf16.gmra.mrb[0].mxu0 %v2068
  %v2104 = vpop.f32.mrb[0].mxu0
  %v2105 = vadd.f32 %v2021, %v2104
  %v2106 = vpop.f32.mrb[0].mxu0
  %v2107 = vadd.f32 %v2023, %v2106
  %v2108 = vpop.f32.mrb[0].mxu0
  %v2109 = vpop.f32.mrb[0].mxu0
  %2110 = vdwg.mxu0
  %v2112 = vlaneseq
  %v2113 = vshrl.u32 %v2112, 7
  %v2114 = vsub.s32 0, %v2113
  %v2115 = vrot.slane %v214, %v2114
  %v2116 = vlaneseq
  %v2117 = vshrl.u32 %v2116, 7
  %v2118 = vsub.s32 1, %v2117
  %v2119 = vrot.slane %v214, %v2118
  %v2122 = vadd.f32 %v2105, %v2115
  %v2123 = vadd.f32 %v2107, %v2119
  %v2124 = vmax.f32 %v2122, 0.0
  %v2125 = vmax.f32 %v2123, 0.0
  %v2126 = vpack.c.bf16 %v2124, %v2124
  %v2127 = vpack.c.bf16 %v2125, %v2125
  %v2160 = vunpack.c.l.b16 %v145
  %v2161 = vunpack.c.l.b16 %v146
  %v2162 = vunpack.c.l.b16 %v147
  %v2163 = vunpack.c.l.b16 %v148
  %v2164 = vunpack.c.l.b16 %v149
  %v2165 = vunpack.c.l.b16 %v150
  %v2166 = vunpack.c.l.b16 %v151
  %v2167 = vunpack.c.l.b16 %v152
  %v2168 = vunpack.c.l.b16 %v153
  %v2169 = vunpack.c.l.b16 %v154
  %v2170 = vunpack.c.l.b16 %v155
  %v2171 = vunpack.c.l.b16 %v156
  %v2172 = vunpack.c.l.b16 %v157
  %v2173 = vunpack.c.l.b16 %v158
  %v2174 = vunpack.c.l.b16 %v159
  %v2175 = vunpack.c.l.b16 %v160
  %v2176 = vunpack.c.l.b16 %v161
  %v2177 = vunpack.c.l.b16 %v162
  %v2178 = vunpack.c.l.b16 %v163
  %v2179 = vunpack.c.l.b16 %v164
  %v2180 = vunpack.c.l.b16 %v165
  %v2181 = vunpack.c.l.b16 %v166
  %v2182 = vunpack.c.l.b16 %v167
  %v2183 = vunpack.c.l.b16 %v168
  %v2184 = vunpack.c.l.b16 %v169
  %v2185 = vunpack.c.l.b16 %v170
  %v2186 = vunpack.c.l.b16 %v171
  %v2187 = vunpack.c.l.b16 %v172
  %v2188 = vunpack.c.l.b16 %v173
  %v2189 = vunpack.c.l.b16 %v174
  %v2190 = vunpack.c.l.b16 %v175
  %v2191 = vunpack.c.l.b16 %v176
  %v2192 = vpack.c.b16 %v2161, %v2160
  %v2193 = vpack.c.b16 %v2163, %v2162
  %v2194 = vpack.c.b16 %v2165, %v2164
  %v2195 = vpack.c.b16 %v2167, %v2166
  %v2196 = vpack.c.b16 %v2169, %v2168
  %v2197 = vpack.c.b16 %v2171, %v2170
  %v2198 = vpack.c.b16 %v2173, %v2172
  %v2199 = vpack.c.b16 %v2175, %v2174
  %v2200 = vpack.c.b16 %v2177, %v2176
  %v2201 = vpack.c.b16 %v2179, %v2178
  %v2202 = vpack.c.b16 %v2181, %v2180
  %v2203 = vpack.c.b16 %v2183, %v2182
  %v2204 = vpack.c.b16 %v2185, %v2184
  %v2205 = vpack.c.b16 %v2187, %v2186
  %v2206 = vpack.c.b16 %v2189, %v2188
  %v2207 = vpack.c.b16 %v2191, %v2190
  %2224 = vmatprep.subr.bf16.mxu0 0
  %2225 = vmatpush1.bf16.msra.mxu0 %v2192
  %2226 = vmatprep.subr.bf16.mxu0 0
  %2227 = vmatpush1.bf16.msra.mxu0 %v2193
  %2228 = vmatprep.subr.bf16.mxu0 0
  %2229 = vmatpush1.bf16.msra.mxu0 %v2194
  %2230 = vmatprep.subr.bf16.mxu0 0
  %2231 = vmatpush1.bf16.msra.mxu0 %v2195
  %2232 = vmatprep.subr.bf16.mxu0 0
  %2233 = vmatpush1.bf16.msra.mxu0 %v2196
  %2234 = vmatprep.subr.bf16.mxu0 0
  %2235 = vmatpush1.bf16.msra.mxu0 %v2197
  %2236 = vmatprep.subr.bf16.mxu0 0
  %2237 = vmatpush1.bf16.msra.mxu0 %v2198
  %2238 = vmatprep.subr.bf16.mxu0 0
  %2239 = vmatpush1.bf16.msra.mxu0 %v2199
  %2240 = vmatprep.subr.bf16.mxu0 0
  %2241 = vmatpush1.bf16.msra.mxu0 %v2200
  %2242 = vmatprep.subr.bf16.mxu0 0
  %2243 = vmatpush1.bf16.msra.mxu0 %v2201
  %2244 = vmatprep.subr.bf16.mxu0 0
  %2245 = vmatpush1.bf16.msra.mxu0 %v2202
  %2246 = vmatprep.subr.bf16.mxu0 0
  %2247 = vmatpush1.bf16.msra.mxu0 %v2203
  %2248 = vmatprep.subr.bf16.mxu0 0
  %2249 = vmatpush1.bf16.msra.mxu0 %v2204
  %2250 = vmatprep.subr.bf16.mxu0 0
  %2251 = vmatpush1.bf16.msra.mxu0 %v2205
  %2252 = vmatprep.subr.bf16.mxu0 0
  %2253 = vmatpush1.bf16.msra.mxu0 %v2206
  %2254 = vmatprep.subr.bf16.mxu0 0
  %2255 = vmatpush1.bf16.msra.mxu0 %v2207
  %2256 = vmatprep.mubr.bf16.mxu0 %v2127
  %2257 = vmatmul.mubr.bf16.gmra.mrb[0].mxu0 %v2126
  %v2258 = vpop.f32.mrb[0].mxu0
  %v2259 = vadd.f32 %v215, %v2258
  %v2260 = vpop.f32.mrb[0].mxu0
  %v2261 = vpop.f32.mrb[0].mxu0
  %v2262 = vpop.f32.mrb[0].mxu0
  %2263 = vdwg.mxu0
  %2264 = vst [vmem:[%s7] sm:$0xff] %v2259
  // Predicated region
  $region30: #{custom_model_forward.1} parent=0 // pred_check
    _
  $region31: #{custom_model_forward.1} parent=0 // pred_check_branch
    %2266 = sbr.rel (0) target = $region33
  $region32: #{custom_model_forward.1} parent=0 // pred_region
    _
  $region33: #{custom_model_forward.1} parent=0 // pred_fallthru
    _
  // Predicated region
  $region34: #{custom_model_forward.1} parent=0 // pred_check
    _
  $region35: #{custom_model_forward.1} parent=0 // pred_check_branch
    %2268 = sbr.rel (0) target = $region37
  $region36: #{custom_model_forward.1} parent=0 // pred_region
    _
  $region37: #{custom_model_forward.1} parent=0 // pred_fallthru
    _

</llo_original>
